<compile_context>
chip_gen: v5e
topology: v5e:2x2
jax: 0.10.0
libtpu: 0.0.40
codegen_flags: <defaults>
</compile_context>

<pallas_src>
import functools
import math

import jax
import jax.numpy as jnp
from jax.experimental import pallas as pl
from jax.experimental.pallas import tpu as pltpu


# ---------------------------------------------------------------------------
# Tiling / budget helpers
# ---------------------------------------------------------------------------
@functools.lru_cache(maxsize=None)
def _vmem_limit_bytes():
    cap = 64 * 1024 * 1024                      # conservative fallback
    try:
        info = pltpu.get_tpu_info()
        cap = int(getattr(info, "vmem_capacity_bytes", cap))
    except Exception:
        pass
    # ~20% headroom for Mosaic internal scratch / pipeline buffers:
    #   v5e/v6e (128 MiB) -> ~102 MiB,  v7x (64 MiB) -> ~51 MiB.
    return int(min(int(cap * 0.8), 110 * 1024 * 1024))


def _largest_divisor_leq(n, cap):
    cap = max(1, min(n, cap))
    for d in range(cap, 0, -1):
        if n % d == 0:
            return d
    return 1


def _pick_row_tile(n, cap):
    # second-minor block dim: multiple of 8, or the full extent.
    if n <= cap:
        return n
    for d in range(cap - cap % 8, 7, -8):
        if n % d == 0:
            return d
    return n


def _pick_lane_tile(n, cap):
    # minor block dim: multiple of 128, or the full extent.
    if n <= cap:
        return n
    for d in range(cap - cap % 128, 127, -128):
        if n % d == 0:
            return d
    return n


def _pick_batch_tile(B, S, row_target=256):
    # Target ~256 rows (Bt*S) per grid step (native MXU tile on v6e/v7x,
    # harmless on v5e), but keep >=2 batch grid steps so both v7x TensorCores
    # / megacore halves get work.
    cap = max(1, row_target // max(1, S))
    if B >= 2:
        cap = min(cap, max(1, B // 2))
    return _largest_divisor_leq(B, cap)


# ---------------------------------------------------------------------------
# Kernel 1: one transformer Block
#   x = x + MultiHeadAttention(LayerNorm1(x))       (grid step f == 0)
#   x = x + MLP(LayerNorm2(x))                      (MLP tiled over F4 = 4H)
# Grid: (batch tiles, F4 chunks); rows flattened to (Bt*S, H).
# ---------------------------------------------------------------------------
def _block_kernel(x_ref, bias_ref, g1_ref, b1_ref,
                  wqkv_ref, bqkv_ref, wp_ref, bp_ref,
                  g2_ref, b2_ref,
                  w1_ref, bf1_ref, w2_ref, bf2_ref,
                  o_ref,
                  x1_scr, xn2_scr, acc_scr,
                  *, n_head, head_size, eps):
    f = pl.program_id(1)
    nf = pl.num_programs(1)
    Bt, S, H = x_ref.shape
    M = Bt * S

    def layernorm(v, g, b):
        mu = jnp.mean(v, axis=-1, keepdims=True)
        var = jnp.mean((v - mu) ** 2, axis=-1, keepdims=True)
        return (v - mu) * jax.lax.rsqrt(var + eps) * g + b

    # ---- f == 0: attention branch, LN2, MLP accumulator init ---------------
    @pl.when(f == 0)
    def _attention():
        x = x_ref[...].astype(jnp.float32).reshape(M, H)
        xn = layernorm(x, g1_ref[0], b1_ref[0]).astype(jnp.bfloat16)

        # One fused QKV matmul (single MXU pass, N = 3H); scale folded into q.
        qkv = (jnp.dot(xn, wqkv_ref[...], preferred_element_type=jnp.float32)
               + bqkv_ref[0])
        scale = 1.0 / math.sqrt(head_size)
        q3 = (qkv[:, :H] * scale).astype(jnp.bfloat16).reshape(Bt, S, H)
        k3 = qkv[:, H:2 * H].astype(jnp.bfloat16).reshape(Bt, S, H)
        v3 = qkv[:, 2 * H:].astype(jnp.bfloat16).reshape(Bt, S, H)

        bias = bias_ref[...][None]          # (1, S, S) additive causal bias

        # Per-head attention; each head's output is folded straight through
        # its Wproj row-slice into an f32 accumulator (no (M, H) concat).
        # Attention dropout / proj dropout are identity (eval mode).
        # TODO(synk): flash-style KV-tiled online softmax for long S.
        att = jnp.zeros((M, H), jnp.float32)
        for h in range(n_head):
            lo = h * head_size
            hi = lo + head_size
            qh, kh, vh = q3[:, :, lo:hi], k3[:, :, lo:hi], v3[:, :, lo:hi]
            s = jnp.einsum('bqd,bkd->bqk', qh, kh,
                           preferred_element_type=jnp.float32) + bias
            s = s - jnp.max(s, axis=-1, keepdims=True)
            e = jnp.exp(s)
            p = (e / jnp.sum(e, axis=-1, keepdims=True)).astype(jnp.bfloat16)
            oh = jnp.einsum('bqk,bkd->bqd', p, vh,
                            preferred_element_type=jnp.float32)
            att = att + jnp.dot(oh.reshape(M, head_size).astype(jnp.bfloat16),
                                wp_ref[lo:hi, :],
                                preferred_element_type=jnp.float32)

        x1 = x + att + bp_ref[0]                       # residual after attn
        x1_scr[...] = x1
        xn2_scr[...] = layernorm(x1, g2_ref[0], b2_ref[0]).astype(jnp.bfloat16)
        acc_scr[...] = jnp.zeros_like(acc_scr)

    # ---- every step: one F4 chunk of the MLP -------------------------------
    h1 = (jnp.dot(xn2_scr[...], w1_ref[...],
                  preferred_element_type=jnp.float32) + bf1_ref[0])
    # tanh GELU (EUP path; exact-erf nn.GELU differs by ~1e-3 max abs).
    h1 = jax.nn.gelu(h1, approximate=True).astype(jnp.bfloat16)
    acc_scr[...] += jnp.dot(h1, w2_ref[...], preferred_element_type=jnp.float32)

    # ---- last step: second residual add, write back -------------------------
    @pl.when(f == nf - 1)
    def _finalize():
        out = x1_scr[...] + acc_scr[...] + bf2_ref[0]   # MLP dropout = identity
        o_ref[...] = out.reshape(Bt, S, H).astype(o_ref.dtype)


def run_block(x, p, *, n_head, head_size, eps=1e-5):
    B, S, H = x.shape
    assert n_head * head_size == H
    F4 = 4 * H
    Bt = _pick_batch_tile(B, S)
    TF = _pick_lane_tile(F4, 2048)        # MLP hidden chunk (~1-2K per review)
    nb, nf = B // Bt, F4 // TF
    M = Bt * S

    # Additive causal bias (0 keep / -1e30 drop), hoisted out of the kernel.
    row = jnp.arange(S, dtype=jnp.int32)[:, None]
    col = jnp.arange(S, dtype=jnp.int32)[None, :]
    causal_bias = jnp.where(row >= col, 0.0, -1e30).astype(jnp.float32)

    kernel = functools.partial(_block_kernel, n_head=n_head,
                               head_size=head_size, eps=eps)

    # Grid-invariant params (constant index map -> DMA'd once per batch tile).
    # TODO(synk): add pipeline_mode=pl.Buffered(1) for these once verified on
    # the target jax rev to avoid double-buffering invariant weights.
    def const(r, c):
        return pl.BlockSpec((r, c), lambda b, f: (0, 0))

    x_spec = pl.BlockSpec((Bt, S, H), lambda b, f: (b, 0, 0))

    return pl.pallas_call(
        kernel,
        out_shape=jax.ShapeDtypeStruct((B, S, H), jnp.bfloat16),
        grid=(nb, nf),
        in_specs=[
            x_spec,                             # residual stream
            const(S, S),                        # causal bias
            const(1, H), const(1, H),           # ln1 gamma / beta
            const(H, 3 * H), const(1, 3 * H),   # fused Wqkv / bqkv
            const(H, H), const(1, H),           # Wproj / bproj
            const(1, H), const(1, H),           # ln2 gamma / beta
            pl.BlockSpec((H, TF), lambda b, f: (0, f)),   # W1 column chunk
            pl.BlockSpec((1, TF), lambda b, f: (0, f)),   # b1 chunk
            pl.BlockSpec((TF, H), lambda b, f: (f, 0)),   # W2 row chunk
            const(1, H),                                  # b2
        ],
        out_specs=x_spec,
        scratch_shapes=[
            pltpu.VMEM((M, H), jnp.float32),    # x + attn (f32 residual)
            pltpu.VMEM((M, H), jnp.bfloat16),   # LN2(x + attn)  (MLP input)
            pltpu.VMEM((M, H), jnp.float32),    # MLP output accumulator
        ],
        input_output_aliases={0: 0},            # residual updated in place
        compiler_params=pltpu.CompilerParams(
            dimension_semantics=("parallel", "arbitrary"),
            vmem_limit_bytes=_vmem_limit_bytes()),
    )(x, causal_bias,
      p["g1"], p["b1"], p["wqkv"], p["bqkv"], p["wp"], p["bp"],
      p["g2"], p["b2"], p["w1"], p["bf1"], p["w2"], p["bf2"])


# ---------------------------------------------------------------------------
# Kernel 2a: final LayerNorm over flattened rows (B*S, H)
# ---------------------------------------------------------------------------
def _final_ln_kernel(x_ref, g_ref, b_ref, o_ref, *, eps):
    x = x_ref[...].astype(jnp.float32)
    mu = jnp.mean(x, axis=-1, keepdims=True)
    var = jnp.mean((x - mu) ** 2, axis=-1, keepdims=True)
    o_ref[...] = ((x - mu) * jax.lax.rsqrt(var + eps) * g_ref[0]
                  + b_ref[0]).astype(o_ref.dtype)


def run_final_ln(x2, gamma, beta, *, eps=1e-5):
    M, H = x2.shape
    TM = _pick_row_tile(M, 512)
    return pl.pallas_call(
        functools.partial(_final_ln_kernel, eps=eps),
        out_shape=jax.ShapeDtypeStruct((M, H), jnp.bfloat16),
        grid=(M // TM,),
        in_specs=[pl.BlockSpec((TM, H), lambda i: (i, 0)),
                  pl.BlockSpec((1, H), lambda i: (0, 0)),
                  pl.BlockSpec((1, H), lambda i: (0, 0))],
        out_specs=pl.BlockSpec((TM, H), lambda i: (i, 0)),
        compiler_params=pltpu.CompilerParams(
            dimension_semantics=("parallel",),
            vmem_limit_bytes=_vmem_limit_bytes()),
    )(x2, gamma, beta)


# ---------------------------------------------------------------------------
# Kernel 2b: lm_head (tied embedding weights, no bias)
# Weight pre-transposed once to (H, V); vocab axis is the OUTER grid axis so
# the big table streams from HBM once while the small x tile re-streams.
# ---------------------------------------------------------------------------
def _lm_head_kernel(x_ref, w_ref, o_ref):
    o_ref[...] = jnp.dot(x_ref[...], w_ref[...],
                         preferred_element_type=jnp.float32).astype(o_ref.dtype)


def run_lm_head(xn, w_t):
    M, H = xn.shape
    V = w_t.shape[1]
    TM = _pick_row_tile(M, 256)
    TV = _pick_lane_tile(V, 1024)      # lane-dense; sized for v7x 64 MiB VMEM
    return pl.pallas_call(
        _lm_head_kernel,
        out_shape=jax.ShapeDtypeStruct((M, V), jnp.bfloat16),
        grid=(V // TV, M // TM),       # vocab outer, rows inner
        in_specs=[pl.BlockSpec((TM, H), lambda j, i: (i, 0)),
                  pl.BlockSpec((H, TV), lambda j, i: (0, j))],
        out_specs=pl.BlockSpec((TM, TV), lambda j, i: (i, j)),
        compiler_params=pltpu.CompilerParams(
            dimension_semantics=("parallel", "parallel"),
            vmem_limit_bytes=_vmem_limit_bytes()),
    )(xn, w_t)


# ---------------------------------------------------------------------------
# Full model forward (plain-JAX glue: embedding gathers, layer loop)
# ---------------------------------------------------------------------------
def llama_forward(idx, params, *, n_head, head_size, eps=1e-5):
    B, S = idx.shape
    tok = jnp.take(params["tok_emb"], idx, axis=0)          # (B, S, H) bf16
    pos = params["pos_emb"][:S][None, :, :]                 # (1, S, H) bf16
    x = (tok + pos).astype(jnp.bfloat16)
    for layer_params in params["blocks"]:
        x = run_block(x, layer_params, n_head=n_head,
                      head_size=head_size, eps=eps)
    M = B * S
    xn = run_final_ln(x.reshape(M, -1), params["gf"], params["bf"], eps=eps)
    w_t = params["tok_emb"].T                                # tied weight (H, V)
    logits = run_lm_head(xn, w_t).reshape(B, S, -1)
    # TODO(synk): cross-entropy loss branch (target is not None) not implemented.
    return logits, None


# ---------------------------------------------------------------------------
# Deterministic parameter construction (weights bf16, LN params / biases f32)
# ---------------------------------------------------------------------------
def init_params(key, *, vocab, max_seq, hidden, n_layer):
    H, F4 = hidden, 4 * hidden
    std = 0.02

    def nrm(k, shape):
        return (std * jax.random.normal(k, shape, dtype=jnp.float32)
                ).astype(jnp.bfloat16)

    keys = jax.random.split(key, 2 + n_layer)
    params = {
        "tok_emb": nrm(keys[0], (vocab, H)),
        "pos_emb": nrm(keys[1], (max_seq, H)),
        "gf": jnp.ones((1, H), jnp.float32),
        "bf": jnp.zeros((1, H), jnp.float32),
        "blocks": [],
    }
    for li in range(n_layer):
        ks = jax.random.split(keys[2 + li], 6)
        wq, wk, wv = nrm(ks[0], (H, H)), nrm(ks[1], (H, H)), nrm(ks[2], (H, H))
        params["blocks"].append({
            "g1": jnp.ones((1, H), jnp.float32),
            "b1": jnp.zeros((1, H), jnp.float32),
            "wqkv": jnp.concatenate([wq, wk, wv], axis=1),     # (H, 3H)
            "bqkv": jnp.zeros((1, 3 * H), jnp.float32),
            "wp": nrm(ks[3], (H, H)),
            "bp": jnp.zeros((1, H), jnp.float32),
            "g2": jnp.ones((1, H), jnp.float32),
            "b2": jnp.zeros((1, H), jnp.float32),
            "w1": nrm(ks[4], (H, F4)),
            "bf1": jnp.zeros((1, F4), jnp.float32),
            "w2": nrm(ks[5], (F4, H)),
            "bf2": jnp.zeros((1, H), jnp.float32),
        })
    return params


if __name__ == "__main__":
    # Small config consistent with the LlamaConfig fields used in forward().
    B, S = 2, 8
    HIDDEN = 32
    N_HEAD = 4
    HEAD_SIZE = HIDDEN // N_HEAD
    VOCAB = 64
    MAX_SEQ = 16
    N_LAYER = 2

    root = jax.random.PRNGKey(0)
    k_idx, k_params = jax.random.split(root)
    idx = jax.random.randint(k_idx, (B, S), 0, VOCAB, dtype=jnp.int32)
    params = init_params(k_params, vocab=VOCAB, max_seq=MAX_SEQ,
                         hidden=HIDDEN, n_layer=N_LAYER)

    logits, loss = llama_forward(idx, params, n_head=N_HEAD,
                                 head_size=HEAD_SIZE)
    logits = jax.block_until_ready(logits)
    assert logits.shape == (B, S, VOCAB)
    assert loss is None
    assert bool(jnp.all(jnp.isfinite(logits.astype(jnp.float32))))
    print("KERNEL_OK")
</pallas_src>

<mosaic_0001>
module attributes {stable_mosaic.version = 11 : i64} {
  func.func @_block_kernel(%arg0: i32, %arg1: i32, %arg2: memref<1x8x32xbf16, #tpu.memory_space<vmem>>, %arg3: memref<8x8xf32, #tpu.memory_space<vmem>>, %arg4: memref<1x32xf32, #tpu.memory_space<vmem>>, %arg5: memref<1x32xf32, #tpu.memory_space<vmem>>, %arg6: memref<32x96xbf16, #tpu.memory_space<vmem>>, %arg7: memref<1x96xf32, #tpu.memory_space<vmem>>, %arg8: memref<32x32xbf16, #tpu.memory_space<vmem>>, %arg9: memref<1x32xf32, #tpu.memory_space<vmem>>, %arg10: memref<1x32xf32, #tpu.memory_space<vmem>>, %arg11: memref<1x32xf32, #tpu.memory_space<vmem>>, %arg12: memref<32x128xbf16, #tpu.memory_space<vmem>>, %arg13: memref<1x128xf32, #tpu.memory_space<vmem>>, %arg14: memref<128x32xbf16, #tpu.memory_space<vmem>>, %arg15: memref<1x32xf32, #tpu.memory_space<vmem>>, %arg16: memref<1x8x32xbf16, #tpu.memory_space<vmem>>, %arg17: memref<8x32xf32, #tpu.memory_space<vmem>>, %arg18: memref<8x32xbf16, #tpu.memory_space<vmem>>, %arg19: memref<8x32xf32, #tpu.memory_space<vmem>>) attributes {dimension_semantics = [#tpu.dimension_semantics<parallel>, #tpu.dimension_semantics<arbitrary>], iteration_bounds = array<i64: 2, 1>, scalar_prefetch = 0 : i64, scratch_operands = 3 : i64, tpu.core_type = #tpu.core_type<tc>, window_params = [{transform_indices = @transform_0, window_bounds = array<i64: 1, 8, 32>}, {pipeline_mode = #tpu.pipeline_mode<synchronous>, transform_indices = @transform_1, window_bounds = array<i64: 8, 8>}, {pipeline_mode = #tpu.pipeline_mode<synchronous>, transform_indices = @transform_2, window_bounds = array<i64: 1, 32>}, {pipeline_mode = #tpu.pipeline_mode<synchronous>, transform_indices = @transform_3, window_bounds = array<i64: 1, 32>}, {pipeline_mode = #tpu.pipeline_mode<synchronous>, transform_indices = @transform_4, window_bounds = array<i64: 32, 96>}, {pipeline_mode = #tpu.pipeline_mode<synchronous>, transform_indices = @transform_5, window_bounds = array<i64: 1, 96>}, {pipeline_mode = #tpu.pipeline_mode<synchronous>, transform_indices = @transform_6, window_bounds = array<i64: 32, 32>}, {pipeline_mode = #tpu.pipeline_mode<synchronous>, transform_indices = @transform_7, window_bounds = array<i64: 1, 32>}, {pipeline_mode = #tpu.pipeline_mode<synchronous>, transform_indices = @transform_8, window_bounds = array<i64: 1, 32>}, {pipeline_mode = #tpu.pipeline_mode<synchronous>, transform_indices = @transform_9, window_bounds = array<i64: 1, 32>}, {transform_indices = @transform_10, window_bounds = array<i64: 32, 128>}, {transform_indices = @transform_11, window_bounds = array<i64: 1, 128>}, {transform_indices = @transform_12, window_bounds = array<i64: 128, 32>}, {pipeline_mode = #tpu.pipeline_mode<synchronous>, transform_indices = @transform_13, window_bounds = array<i64: 1, 32>}, {transform_indices = @transform_14, window_bounds = array<i64: 1, 8, 32>}]} {
    %c0_i32 = arith.constant 0 : i32
    %0 = arith.cmpi eq, %arg1, %c0_i32 : i32
    %1 = arith.extui %0 : i1 to i32
    %c0_i32_0 = arith.constant 0 : i32
    %2 = arith.cmpi ne, %1, %c0_i32_0 : i32
    scf.if %2 {
      %c0_19 = arith.constant 0 : index
      %c0_20 = arith.constant 0 : index
      %c0_21 = arith.constant 0 : index
      %33 = vector.load %arg2[%c0_19, %c0_20, %c0_21] : memref<1x8x32xbf16, #tpu.memory_space<vmem>>, vector<1x8x32xbf16>
      %34 = arith.extf %33 : vector<1x8x32xbf16> to vector<1x8x32xf32>
      %35 = vector.shape_cast %34 : vector<1x8x32xf32> to vector<8x32xf32>
      %c0_22 = arith.constant 0 : index
      %c0_23 = arith.constant 0 : index
      %36 = vector.load %arg4[%c0_22, %c0_23] : memref<1x32xf32, #tpu.memory_space<vmem>>, vector<1x32xf32>
      %37 = vector.shape_cast %36 : vector<1x32xf32> to vector<32xf32>
      %c0_24 = arith.constant 0 : index
      %c0_25 = arith.constant 0 : index
      %38 = vector.load %arg5[%c0_24, %c0_25] : memref<1x32xf32, #tpu.memory_space<vmem>>, vector<1x32xf32>
      %39 = vector.shape_cast %38 : vector<1x32xf32> to vector<32xf32>
      %cst_26 = arith.constant dense<0.000000e+00> : vector<8xf32>
      %40 = vector.multi_reduction <add>, %35, %cst_26 [1] : vector<8x32xf32> to vector<8xf32>
      %41 = vector.shape_cast %40 : vector<8xf32> to vector<8x1xf32>
      %cst_27 = arith.constant 3.200000e+01 : f32
      %42 = vector.broadcast %cst_27 : f32 to vector<8x1xf32>
      %43 = arith.divf %41, %42 : vector<8x1xf32>
      %44 = vector.broadcast %43 : vector<8x1xf32> to vector<8x32xf32>
      %45 = arith.subf %35, %44 : vector<8x32xf32>
      %46 = arith.mulf %45, %45 : vector<8x32xf32>
      %cst_28 = arith.constant dense<0.000000e+00> : vector<8xf32>
      %47 = vector.multi_reduction <add>, %46, %cst_28 [1] : vector<8x32xf32> to vector<8xf32>
      %48 = vector.shape_cast %47 : vector<8xf32> to vector<8x1xf32>
      %cst_29 = arith.constant 3.200000e+01 : f32
      %49 = vector.broadcast %cst_29 : f32 to vector<8x1xf32>
      %50 = arith.divf %48, %49 : vector<8x1xf32>
      %51 = vector.broadcast %43 : vector<8x1xf32> to vector<8x32xf32>
      %52 = arith.subf %35, %51 : vector<8x32xf32>
      %cst_30 = arith.constant 9.99999974E-6 : f32
      %53 = vector.broadcast %cst_30 : f32 to vector<8x1xf32>
      %54 = arith.addf %50, %53 : vector<8x1xf32>
      %55 = math.rsqrt %54 : vector<8x1xf32>
      %56 = vector.broadcast %55 : vector<8x1xf32> to vector<8x32xf32>
      %57 = arith.mulf %52, %56 : vector<8x32xf32>
      %58 = vector.shape_cast %37 : vector<32xf32> to vector<1x32xf32>
      %59 = vector.broadcast %58 : vector<1x32xf32> to vector<8x32xf32>
      %60 = arith.mulf %57, %59 : vector<8x32xf32>
      %61 = vector.shape_cast %39 : vector<32xf32> to vector<1x32xf32>
      %62 = vector.broadcast %61 : vector<1x32xf32> to vector<8x32xf32>
      %63 = arith.addf %60, %62 : vector<8x32xf32>
      %64 = arith.truncf %63 : vector<8x32xf32> to vector<8x32xbf16>
      %c0_31 = arith.constant 0 : index
      %c0_32 = arith.constant 0 : index
      %65 = vector.load %arg6[%c0_31, %c0_32] : memref<32x96xbf16, #tpu.memory_space<vmem>>, vector<32x96xbf16>
      %cst_33 = arith.constant dense<0.000000e+00> : vector<8x96xf32>
      %66 = tpu.matmul %64, %65, %cst_33 {dimension_numbers = #tpu.dot_dimension_numbers<[1], [0], [0], [1], [0, 0, 1, 1], [], []>} : vector<8x32xbf16>, vector<32x96xbf16>, vector<8x96xf32> -> vector<8x96xf32>
      %c0_34 = arith.constant 0 : index
      %c0_35 = arith.constant 0 : index
      %67 = vector.load %arg7[%c0_34, %c0_35] : memref<1x96xf32, #tpu.memory_space<vmem>>, vector<1x96xf32>
      %68 = vector.shape_cast %67 : vector<1x96xf32> to vector<96xf32>
      %69 = vector.shape_cast %68 : vector<96xf32> to vector<1x96xf32>
      %70 = vector.broadcast %69 : vector<1x96xf32> to vector<8x96xf32>
      %71 = arith.addf %66, %70 : vector<8x96xf32>
      %72 = vector.extract_strided_slice %71 {offsets = [0, 0], sizes = [8, 32], strides = [1, 1]} : vector<8x96xf32> to vector<8x32xf32>
      %cst_36 = arith.constant 0.353553385 : f32
      %73 = vector.broadcast %cst_36 : f32 to vector<8x32xf32>
      %74 = arith.mulf %72, %73 : vector<8x32xf32>
      %75 = arith.truncf %74 : vector<8x32xf32> to vector<8x32xbf16>
      %76 = vector.shape_cast %75 : vector<8x32xbf16> to vector<1x8x32xbf16>
      %77 = vector.extract_strided_slice %71 {offsets = [0, 32], sizes = [8, 32], strides = [1, 1]} : vector<8x96xf32> to vector<8x32xf32>
      %78 = arith.truncf %77 : vector<8x32xf32> to vector<8x32xbf16>
      %79 = vector.shape_cast %78 : vector<8x32xbf16> to vector<1x8x32xbf16>
      %80 = vector.extract_strided_slice %71 {offsets = [0, 64], sizes = [8, 32], strides = [1, 1]} : vector<8x96xf32> to vector<8x32xf32>
      %81 = arith.truncf %80 : vector<8x32xf32> to vector<8x32xbf16>
      %82 = vector.shape_cast %81 : vector<8x32xbf16> to vector<1x8x32xbf16>
      %c0_37 = arith.constant 0 : index
      %c0_38 = arith.constant 0 : index
      %83 = vector.load %arg3[%c0_37, %c0_38] : memref<8x8xf32, #tpu.memory_space<vmem>>, vector<8x8xf32>
      %84 = vector.shape_cast %83 : vector<8x8xf32> to vector<1x8x8xf32>
      %cst_39 = arith.constant 0.000000e+00 : f32
      %85 = vector.broadcast %cst_39 : f32 to vector<8x32xf32>
      %86 = vector.extract_strided_slice %76 {offsets = [0, 0, 0], sizes = [1, 8, 8], strides = [1, 1, 1]} : vector<1x8x32xbf16> to vector<1x8x8xbf16>
      %87 = vector.extract_strided_slice %79 {offsets = [0, 0, 0], sizes = [1, 8, 8], strides = [1, 1, 1]} : vector<1x8x32xbf16> to vector<1x8x8xbf16>
      %88 = vector.extract_strided_slice %82 {offsets = [0, 0, 0], sizes = [1, 8, 8], strides = [1, 1, 1]} : vector<1x8x32xbf16> to vector<1x8x8xbf16>
      "tpu.trace_start"() <{level = 10 : i32, message = "bqd,bkd->bqk"}> : () -> ()
      %cst_40 = arith.constant dense<0.000000e+00> : vector<1x8x8xf32>
      %89 = tpu.matmul %86, %87, %cst_40 {dimension_numbers = #tpu.dot_dimension_numbers<[2], [2], [1], [1], [0, 0, 0, 1, 1, 1], [0], [0]>} : vector<1x8x8xbf16>, vector<1x8x8xbf16>, vector<1x8x8xf32> -> vector<1x8x8xf32>
      "tpu.trace_stop"() : () -> ()
      %90 = arith.addf %89, %84 : vector<1x8x8xf32>
      %cst_41 = arith.constant dense<0xFF800000> : vector<1x8xf32>
      %91 = vector.multi_reduction <maximumf>, %90, %cst_41 [2] : vector<1x8x8xf32> to vector<1x8xf32>
      %92 = vector.shape_cast %91 : vector<1x8xf32> to vector<1x8x1xf32>
      %93 = vector.broadcast %92 : vector<1x8x1xf32> to vector<1x8x8xf32>
      %94 = arith.subf %90, %93 : vector<1x8x8xf32>
      %95 = math.exp %94 : vector<1x8x8xf32>
      %cst_42 = arith.constant dense<0.000000e+00> : vector<1x8xf32>
      %96 = vector.multi_reduction <add>, %95, %cst_42 [2] : vector<1x8x8xf32> to vector<1x8xf32>
      %97 = vector.shape_cast %96 : vector<1x8xf32> to vector<1x8x1xf32>
      %98 = vector.broadcast %97 : vector<1x8x1xf32> to vector<1x8x8xf32>
      %99 = arith.divf %95, %98 : vector<1x8x8xf32>
      %100 = arith.truncf %99 : vector<1x8x8xf32> to vector<1x8x8xbf16>
      "tpu.trace_start"() <{level = 10 : i32, message = "bqk,bkd->bqd"}> : () -> ()
      %cst_43 = arith.constant dense<0.000000e+00> : vector<1x8x8xf32>
      %101 = tpu.matmul %100, %88, %cst_43 {dimension_numbers = #tpu.dot_dimension_numbers<[2], [1], [1], [2], [0, 0, 0, 1, 1, 2], [0], [0]>} : vector<1x8x8xbf16>, vector<1x8x8xbf16>, vector<1x8x8xf32> -> vector<1x8x8xf32>
      "tpu.trace_stop"() : () -> ()
      %102 = vector.shape_cast %101 : vector<1x8x8xf32> to vector<8x8xf32>
      %103 = arith.truncf %102 : vector<8x8xf32> to vector<8x8xbf16>
      %c0_44 = arith.constant 0 : index
      %c0_45 = arith.constant 0 : index
      %104 = vector.load %arg8[%c0_44, %c0_45] : memref<32x32xbf16, #tpu.memory_space<vmem>>, vector<8x32xbf16>
      %cst_46 = arith.constant dense<0.000000e+00> : vector<8x32xf32>
      %105 = tpu.matmul %103, %104, %cst_46 {dimension_numbers = #tpu.dot_dimension_numbers<[1], [0], [0], [1], [0, 0, 1, 1], [], []>} : vector<8x8xbf16>, vector<8x32xbf16>, vector<8x32xf32> -> vector<8x32xf32>
      %106 = arith.addf %85, %105 : vector<8x32xf32>
      %107 = vector.extract_strided_slice %76 {offsets = [0, 0, 8], sizes = [1, 8, 8], strides = [1, 1, 1]} : vector<1x8x32xbf16> to vector<1x8x8xbf16>
      %108 = vector.extract_strided_slice %79 {offsets = [0, 0, 8], sizes = [1, 8, 8], strides = [1, 1, 1]} : vector<1x8x32xbf16> to vector<1x8x8xbf16>
      %109 = vector.extract_strided_slice %82 {offsets = [0, 0, 8], sizes = [1, 8, 8], strides = [1, 1, 1]} : vector<1x8x32xbf16> to vector<1x8x8xbf16>
      "tpu.trace_start"() <{level = 10 : i32, message = "bqd,bkd->bqk"}> : () -> ()
      %cst_47 = arith.constant dense<0.000000e+00> : vector<1x8x8xf32>
      %110 = tpu.matmul %107, %108, %cst_47 {dimension_numbers = #tpu.dot_dimension_numbers<[2], [2], [1], [1], [0, 0, 0, 1, 1, 1], [0], [0]>} : vector<1x8x8xbf16>, vector<1x8x8xbf16>, vector<1x8x8xf32> -> vector<1x8x8xf32>
      "tpu.trace_stop"() : () -> ()
      %111 = arith.addf %110, %84 : vector<1x8x8xf32>
      %cst_48 = arith.constant dense<0xFF800000> : vector<1x8xf32>
      %112 = vector.multi_reduction <maximumf>, %111, %cst_48 [2] : vector<1x8x8xf32> to vector<1x8xf32>
      %113 = vector.shape_cast %112 : vector<1x8xf32> to vector<1x8x1xf32>
      %114 = vector.broadcast %113 : vector<1x8x1xf32> to vector<1x8x8xf32>
      %115 = arith.subf %111, %114 : vector<1x8x8xf32>
      %116 = math.exp %115 : vector<1x8x8xf32>
      %cst_49 = arith.constant dense<0.000000e+00> : vector<1x8xf32>
      %117 = vector.multi_reduction <add>, %116, %cst_49 [2] : vector<1x8x8xf32> to vector<1x8xf32>
      %118 = vector.shape_cast %117 : vector<1x8xf32> to vector<1x8x1xf32>
      %119 = vector.broadcast %118 : vector<1x8x1xf32> to vector<1x8x8xf32>
      %120 = arith.divf %116, %119 : vector<1x8x8xf32>
      %121 = arith.truncf %120 : vector<1x8x8xf32> to vector<1x8x8xbf16>
      "tpu.trace_start"() <{level = 10 : i32, message = "bqk,bkd->bqd"}> : () -> ()
      %cst_50 = arith.constant dense<0.000000e+00> : vector<1x8x8xf32>
      %122 = tpu.matmul %121, %109, %cst_50 {dimension_numbers = #tpu.dot_dimension_numbers<[2], [1], [1], [2], [0, 0, 0, 1, 1, 2], [0], [0]>} : vector<1x8x8xbf16>, vector<1x8x8xbf16>, vector<1x8x8xf32> -> vector<1x8x8xf32>
      "tpu.trace_stop"() : () -> ()
      %123 = vector.shape_cast %122 : vector<1x8x8xf32> to vector<8x8xf32>
      %124 = arith.truncf %123 : vector<8x8xf32> to vector<8x8xbf16>
      %c8 = arith.constant 8 : index
      %c0_51 = arith.constant 0 : index
      %125 = vector.load %arg8[%c8, %c0_51] : memref<32x32xbf16, #tpu.memory_space<vmem>>, vector<8x32xbf16>
      %cst_52 = arith.constant dense<0.000000e+00> : vector<8x32xf32>
      %126 = tpu.matmul %124, %125, %cst_52 {dimension_numbers = #tpu.dot_dimension_numbers<[1], [0], [0], [1], [0, 0, 1, 1], [], []>} : vector<8x8xbf16>, vector<8x32xbf16>, vector<8x32xf32> -> vector<8x32xf32>
      %127 = arith.addf %106, %126 : vector<8x32xf32>
      %128 = vector.extract_strided_slice %76 {offsets = [0, 0, 16], sizes = [1, 8, 8], strides = [1, 1, 1]} : vector<1x8x32xbf16> to vector<1x8x8xbf16>
      %129 = vector.extract_strided_slice %79 {offsets = [0, 0, 16], sizes = [1, 8, 8], strides = [1, 1, 1]} : vector<1x8x32xbf16> to vector<1x8x8xbf16>
      %130 = vector.extract_strided_slice %82 {offsets = [0, 0, 16], sizes = [1, 8, 8], strides = [1, 1, 1]} : vector<1x8x32xbf16> to vector<1x8x8xbf16>
      "tpu.trace_start"() <{level = 10 : i32, message = "bqd,bkd->bqk"}> : () -> ()
      %cst_53 = arith.constant dense<0.000000e+00> : vector<1x8x8xf32>
      %131 = tpu.matmul %128, %129, %cst_53 {dimension_numbers = #tpu.dot_dimension_numbers<[2], [2], [1], [1], [0, 0, 0, 1, 1, 1], [0], [0]>} : vector<1x8x8xbf16>, vector<1x8x8xbf16>, vector<1x8x8xf32> -> vector<1x8x8xf32>
      "tpu.trace_stop"() : () -> ()
      %132 = arith.addf %131, %84 : vector<1x8x8xf32>
      %cst_54 = arith.constant dense<0xFF800000> : vector<1x8xf32>
      %133 = vector.multi_reduction <maximumf>, %132, %cst_54 [2] : vector<1x8x8xf32> to vector<1x8xf32>
      %134 = vector.shape_cast %133 : vector<1x8xf32> to vector<1x8x1xf32>
      %135 = vector.broadcast %134 : vector<1x8x1xf32> to vector<1x8x8xf32>
      %136 = arith.subf %132, %135 : vector<1x8x8xf32>
      %137 = math.exp %136 : vector<1x8x8xf32>
      %cst_55 = arith.constant dense<0.000000e+00> : vector<1x8xf32>
      %138 = vector.multi_reduction <add>, %137, %cst_55 [2] : vector<1x8x8xf32> to vector<1x8xf32>
      %139 = vector.shape_cast %138 : vector<1x8xf32> to vector<1x8x1xf32>
      %140 = vector.broadcast %139 : vector<1x8x1xf32> to vector<1x8x8xf32>
      %141 = arith.divf %137, %140 : vector<1x8x8xf32>
      %142 = arith.truncf %141 : vector<1x8x8xf32> to vector<1x8x8xbf16>
      "tpu.trace_start"() <{level = 10 : i32, message = "bqk,bkd->bqd"}> : () -> ()
      %cst_56 = arith.constant dense<0.000000e+00> : vector<1x8x8xf32>
      %143 = tpu.matmul %142, %130, %cst_56 {dimension_numbers = #tpu.dot_dimension_numbers<[2], [1], [1], [2], [0, 0, 0, 1, 1, 2], [0], [0]>} : vector<1x8x8xbf16>, vector<1x8x8xbf16>, vector<1x8x8xf32> -> vector<1x8x8xf32>
      "tpu.trace_stop"() : () -> ()
      %144 = vector.shape_cast %143 : vector<1x8x8xf32> to vector<8x8xf32>
      %145 = arith.truncf %144 : vector<8x8xf32> to vector<8x8xbf16>
      %c16 = arith.constant 16 : index
      %c0_57 = arith.constant 0 : index
      %146 = vector.load %arg8[%c16, %c0_57] : memref<32x32xbf16, #tpu.memory_space<vmem>>, vector<8x32xbf16>
      %cst_58 = arith.constant dense<0.000000e+00> : vector<8x32xf32>
      %147 = tpu.matmul %145, %146, %cst_58 {dimension_numbers = #tpu.dot_dimension_numbers<[1], [0], [0], [1], [0, 0, 1, 1], [], []>} : vector<8x8xbf16>, vector<8x32xbf16>, vector<8x32xf32> -> vector<8x32xf32>
      %148 = arith.addf %127, %147 : vector<8x32xf32>
      %149 = vector.extract_strided_slice %76 {offsets = [0, 0, 24], sizes = [1, 8, 8], strides = [1, 1, 1]} : vector<1x8x32xbf16> to vector<1x8x8xbf16>
      %150 = vector.extract_strided_slice %79 {offsets = [0, 0, 24], sizes = [1, 8, 8], strides = [1, 1, 1]} : vector<1x8x32xbf16> to vector<1x8x8xbf16>
      %151 = vector.extract_strided_slice %82 {offsets = [0, 0, 24], sizes = [1, 8, 8], strides = [1, 1, 1]} : vector<1x8x32xbf16> to vector<1x8x8xbf16>
      "tpu.trace_start"() <{level = 10 : i32, message = "bqd,bkd->bqk"}> : () -> ()
      %cst_59 = arith.constant dense<0.000000e+00> : vector<1x8x8xf32>
      %152 = tpu.matmul %149, %150, %cst_59 {dimension_numbers = #tpu.dot_dimension_numbers<[2], [2], [1], [1], [0, 0, 0, 1, 1, 1], [0], [0]>} : vector<1x8x8xbf16>, vector<1x8x8xbf16>, vector<1x8x8xf32> -> vector<1x8x8xf32>
      "tpu.trace_stop"() : () -> ()
      %153 = arith.addf %152, %84 : vector<1x8x8xf32>
      %cst_60 = arith.constant dense<0xFF800000> : vector<1x8xf32>
      %154 = vector.multi_reduction <maximumf>, %153, %cst_60 [2] : vector<1x8x8xf32> to vector<1x8xf32>
      %155 = vector.shape_cast %154 : vector<1x8xf32> to vector<1x8x1xf32>
      %156 = vector.broadcast %155 : vector<1x8x1xf32> to vector<1x8x8xf32>
      %157 = arith.subf %153, %156 : vector<1x8x8xf32>
      %158 = math.exp %157 : vector<1x8x8xf32>
      %cst_61 = arith.constant dense<0.000000e+00> : vector<1x8xf32>
      %159 = vector.multi_reduction <add>, %158, %cst_61 [2] : vector<1x8x8xf32> to vector<1x8xf32>
      %160 = vector.shape_cast %159 : vector<1x8xf32> to vector<1x8x1xf32>
      %161 = vector.broadcast %160 : vector<1x8x1xf32> to vector<1x8x8xf32>
      %162 = arith.divf %158, %161 : vector<1x8x8xf32>
      %163 = arith.truncf %162 : vector<1x8x8xf32> to vector<1x8x8xbf16>
      "tpu.trace_start"() <{level = 10 : i32, message = "bqk,bkd->bqd"}> : () -> ()
      %cst_62 = arith.constant dense<0.000000e+00> : vector<1x8x8xf32>
      %164 = tpu.matmul %163, %151, %cst_62 {dimension_numbers = #tpu.dot_dimension_numbers<[2], [1], [1], [2], [0, 0, 0, 1, 1, 2], [0], [0]>} : vector<1x8x8xbf16>, vector<1x8x8xbf16>, vector<1x8x8xf32> -> vector<1x8x8xf32>
      "tpu.trace_stop"() : () -> ()
      %165 = vector.shape_cast %164 : vector<1x8x8xf32> to vector<8x8xf32>
      %166 = arith.truncf %165 : vector<8x8xf32> to vector<8x8xbf16>
      %c24 = arith.constant 24 : index
      %c0_63 = arith.constant 0 : index
      %167 = vector.load %arg8[%c24, %c0_63] : memref<32x32xbf16, #tpu.memory_space<vmem>>, vector<8x32xbf16>
      %cst_64 = arith.constant dense<0.000000e+00> : vector<8x32xf32>
      %168 = tpu.matmul %166, %167, %cst_64 {dimension_numbers = #tpu.dot_dimension_numbers<[1], [0], [0], [1], [0, 0, 1, 1], [], []>} : vector<8x8xbf16>, vector<8x32xbf16>, vector<8x32xf32> -> vector<8x32xf32>
      %169 = arith.addf %148, %168 : vector<8x32xf32>
      %170 = arith.addf %35, %169 : vector<8x32xf32>
      %c0_65 = arith.constant 0 : index
      %c0_66 = arith.constant 0 : index
      %171 = vector.load %arg9[%c0_65, %c0_66] : memref<1x32xf32, #tpu.memory_space<vmem>>, vector<1x32xf32>
      %172 = vector.shape_cast %171 : vector<1x32xf32> to vector<32xf32>
      %173 = vector.shape_cast %172 : vector<32xf32> to vector<1x32xf32>
      %174 = vector.broadcast %173 : vector<1x32xf32> to vector<8x32xf32>
      %175 = arith.addf %170, %174 : vector<8x32xf32>
      %c0_67 = arith.constant 0 : index
      %c0_68 = arith.constant 0 : index
      %176 = vector.load %arg17[%c0_67, %c0_68] : memref<8x32xf32, #tpu.memory_space<vmem>>, vector<8x32xf32>
      tpu.vector_store %arg17[%c0_67, %c0_68], %175 {strides = array<i32>} : memref<8x32xf32, #tpu.memory_space<vmem>>, vector<8x32xf32>,
      %c0_69 = arith.constant 0 : index
      %c0_70 = arith.constant 0 : index
      %177 = vector.load %arg10[%c0_69, %c0_70] : memref<1x32xf32, #tpu.memory_space<vmem>>, vector<1x32xf32>
      %178 = vector.shape_cast %177 : vector<1x32xf32> to vector<32xf32>
      %c0_71 = arith.constant 0 : index
      %c0_72 = arith.constant 0 : index
      %179 = vector.load %arg11[%c0_71, %c0_72] : memref<1x32xf32, #tpu.memory_space<vmem>>, vector<1x32xf32>
      %180 = vector.shape_cast %179 : vector<1x32xf32> to vector<32xf32>
      %cst_73 = arith.constant dense<0.000000e+00> : vector<8xf32>
      %181 = vector.multi_reduction <add>, %175, %cst_73 [1] : vector<8x32xf32> to vector<8xf32>
      %182 = vector.shape_cast %181 : vector<8xf32> to vector<8x1xf32>
      %cst_74 = arith.constant 3.200000e+01 : f32
      %183 = vector.broadcast %cst_74 : f32 to vector<8x1xf32>
      %184 = arith.divf %182, %183 : vector<8x1xf32>
      %185 = vector.broadcast %184 : vector<8x1xf32> to vector<8x32xf32>
      %186 = arith.subf %175, %185 : vector<8x32xf32>
      %187 = arith.mulf %186, %186 : vector<8x32xf32>
      %cst_75 = arith.constant dense<0.000000e+00> : vector<8xf32>
      %188 = vector.multi_reduction <add>, %187, %cst_75 [1] : vector<8x32xf32> to vector<8xf32>
      %189 = vector.shape_cast %188 : vector<8xf32> to vector<8x1xf32>
      %cst_76 = arith.constant 3.200000e+01 : f32
      %190 = vector.broadcast %cst_76 : f32 to vector<8x1xf32>
      %191 = arith.divf %189, %190 : vector<8x1xf32>
      %192 = vector.broadcast %184 : vector<8x1xf32> to vector<8x32xf32>
      %193 = arith.subf %175, %192 : vector<8x32xf32>
      %cst_77 = arith.constant 9.99999974E-6 : f32
      %194 = vector.broadcast %cst_77 : f32 to vector<8x1xf32>
      %195 = arith.addf %191, %194 : vector<8x1xf32>
      %196 = math.rsqrt %195 : vector<8x1xf32>
      %197 = vector.broadcast %196 : vector<8x1xf32> to vector<8x32xf32>
      %198 = arith.mulf %193, %197 : vector<8x32xf32>
      %199 = vector.shape_cast %178 : vector<32xf32> to vector<1x32xf32>
      %200 = vector.broadcast %199 : vector<1x32xf32> to vector<8x32xf32>
      %201 = arith.mulf %198, %200 : vector<8x32xf32>
      %202 = vector.shape_cast %180 : vector<32xf32> to vector<1x32xf32>
      %203 = vector.broadcast %202 : vector<1x32xf32> to vector<8x32xf32>
      %204 = arith.addf %201, %203 : vector<8x32xf32>
      %205 = arith.truncf %204 : vector<8x32xf32> to vector<8x32xbf16>
      %c0_78 = arith.constant 0 : index
      %c0_79 = arith.constant 0 : index
      %206 = vector.load %arg18[%c0_78, %c0_79] : memref<8x32xbf16, #tpu.memory_space<vmem>>, vector<8x32xbf16>
      tpu.vector_store %arg18[%c0_78, %c0_79], %205 {strides = array<i32>} : memref<8x32xbf16, #tpu.memory_space<vmem>>, vector<8x32xbf16>,
      %cst_80 = arith.constant 0.000000e+00 : f32
      %207 = vector.broadcast %cst_80 : f32 to vector<8x32xf32>
      %c0_81 = arith.constant 0 : index
      %c0_82 = arith.constant 0 : index
      %208 = vector.load %arg19[%c0_81, %c0_82] : memref<8x32xf32, #tpu.memory_space<vmem>>, vector<8x32xf32>
      tpu.vector_store %arg19[%c0_81, %c0_82], %207 {strides = array<i32>} : memref<8x32xf32, #tpu.memory_space<vmem>>, vector<8x32xf32>,
    } else {
    }
    %c0 = arith.constant 0 : index
    %c0_1 = arith.constant 0 : index
    %3 = vector.load %arg18[%c0, %c0_1] : memref<8x32xbf16, #tpu.memory_space<vmem>>, vector<8x32xbf16>
    %c0_2 = arith.constant 0 : index
    %c0_3 = arith.constant 0 : index
    %4 = vector.load %arg12[%c0_2, %c0_3] : memref<32x128xbf16, #tpu.memory_space<vmem>>, vector<32x128xbf16>
    %cst = arith.constant dense<0.000000e+00> : vector<8x128xf32>
    %5 = tpu.matmul %3, %4, %cst {dimension_numbers = #tpu.dot_dimension_numbers<[1], [0], [0], [1], [0, 0, 1, 1], [], []>} : vector<8x32xbf16>, vector<32x128xbf16>, vector<8x128xf32> -> vector<8x128xf32>
    %c0_4 = arith.constant 0 : index
    %c0_5 = arith.constant 0 : index
    %6 = vector.load %arg13[%c0_4, %c0_5] : memref<1x128xf32, #tpu.memory_space<vmem>>, vector<1x128xf32>
    %7 = vector.shape_cast %6 : vector<1x128xf32> to vector<128xf32>
    %8 = vector.shape_cast %7 : vector<128xf32> to vector<1x128xf32>
    %9 = vector.broadcast %8 : vector<1x128xf32> to vector<8x128xf32>
    %10 = arith.addf %5, %9 : vector<8x128xf32>
    %11 = arith.mulf %10, %10 : vector<8x128xf32>
    %12 = arith.mulf %10, %11 : vector<8x128xf32>
    %cst_6 = arith.constant 4.471500e-02 : f32
    %13 = vector.broadcast %cst_6 : f32 to vector<8x128xf32>
    %14 = arith.mulf %13, %12 : vector<8x128xf32>
    %15 = arith.addf %10, %14 : vector<8x128xf32>
    %cst_7 = arith.constant 0.797884583 : f32
    %16 = vector.broadcast %cst_7 : f32 to vector<8x128xf32>
    %17 = arith.mulf %16, %15 : vector<8x128xf32>
    %18 = math.tanh %17 : vector<8x128xf32>
    %cst_8 = arith.constant 1.000000e+00 : f32
    %19 = vector.broadcast %cst_8 : f32 to vector<8x128xf32>
    %20 = arith.addf %19, %18 : vector<8x128xf32>
    %cst_9 = arith.constant 5.000000e-01 : f32
    %21 = vector.broadcast %cst_9 : f32 to vector<8x128xf32>
    %22 = arith.mulf %21, %20 : vector<8x128xf32>
    %23 = arith.mulf %10, %22 : vector<8x128xf32>
    %24 = arith.truncf %23 : vector<8x128xf32> to vector<8x128xbf16>
    %c0_10 = arith.constant 0 : index
    %c0_11 = arith.constant 0 : index
    %25 = vector.load %arg19[%c0_10, %c0_11] : memref<8x32xf32, #tpu.memory_space<vmem>>, vector<8x32xf32>
    %c0_12 = arith.constant 0 : index
    %c0_13 = arith.constant 0 : index
    %26 = vector.load %arg14[%c0_12, %c0_13] : memref<128x32xbf16, #tpu.memory_space<vmem>>, vector<128x32xbf16>
    %cst_14 = arith.constant dense<0.000000e+00> : vector<8x32xf32>
    %27 = tpu.matmul %24, %26, %cst_14 {dimension_numbers = #tpu.dot_dimension_numbers<[1], [0], [0], [1], [0, 0, 1, 1], [], []>} : vector<8x128xbf16>, vector<128x32xbf16>, vector<8x32xf32> -> vector<8x32xf32>
    %28 = arith.addf %25, %27 : vector<8x32xf32>
    %c0_15 = arith.constant 0 : index
    %c0_16 = arith.constant 0 : index
    %29 = vector.load %arg19[%c0_15, %c0_16] : memref<8x32xf32, #tpu.memory_space<vmem>>, vector<8x32xf32>
    tpu.vector_store %arg19[%c0_15, %c0_16], %28 {strides = array<i32>} : memref<8x32xf32, #tpu.memory_space<vmem>>, vector<8x32xf32>,
    %c0_i32_17 = arith.constant 0 : i32
    %30 = arith.cmpi eq, %arg1, %c0_i32_17 : i32
    %31 = arith.extui %30 : i1 to i32
    %c0_i32_18 = arith.constant 0 : i32
    %32 = arith.cmpi ne, %31, %c0_i32_18 : i32
    scf.if %32 {
      %c0_19 = arith.constant 0 : index
      %c0_20 = arith.constant 0 : index
      %33 = vector.load %arg17[%c0_19, %c0_20] : memref<8x32xf32, #tpu.memory_space<vmem>>, vector<8x32xf32>
      %c0_21 = arith.constant 0 : index
      %c0_22 = arith.constant 0 : index
      %34 = vector.load %arg19[%c0_21, %c0_22] : memref<8x32xf32, #tpu.memory_space<vmem>>, vector<8x32xf32>
      %35 = arith.addf %33, %34 : vector<8x32xf32>
      %c0_23 = arith.constant 0 : index
      %c0_24 = arith.constant 0 : index
      %36 = vector.load %arg15[%c0_23, %c0_24] : memref<1x32xf32, #tpu.memory_space<vmem>>, vector<1x32xf32>
      %37 = vector.shape_cast %36 : vector<1x32xf32> to vector<32xf32>
      %38 = vector.shape_cast %37 : vector<32xf32> to vector<1x32xf32>
      %39 = vector.broadcast %38 : vector<1x32xf32> to vector<8x32xf32>
      %40 = arith.addf %35, %39 : vector<8x32xf32>
      %41 = vector.shape_cast %40 : vector<8x32xf32> to vector<1x8x32xf32>
      %42 = arith.truncf %41 : vector<1x8x32xf32> to vector<1x8x32xbf16>
      %c0_25 = arith.constant 0 : index
      %c0_26 = arith.constant 0 : index
      %c0_27 = arith.constant 0 : index
      %43 = vector.load %arg16[%c0_25, %c0_26, %c0_27] : memref<1x8x32xbf16, #tpu.memory_space<vmem>>, vector<1x8x32xbf16>
      tpu.vector_store %arg16[%c0_25, %c0_26, %c0_27], %42 {strides = array<i32>} : memref<1x8x32xbf16, #tpu.memory_space<vmem>>, vector<1x8x32xbf16>,
    } else {
    }
    return
  }
  func.func @transform_0(%arg0: i32, %arg1: i32) -> (i32, i32, i32) {
    %c0_i32 = arith.constant 0 : i32
    %c0_i32_0 = arith.constant 0 : i32
    %c0_i32_1 = arith.constant 0 : i32
    return %arg0, %c0_i32, %c0_i32_0 : i32, i32, i32
  }
  func.func @transform_1(%arg0: i32, %arg1: i32) -> (i32, i32) {
    %c0_i32 = arith.constant 0 : i32
    %c0_i32_0 = arith.constant 0 : i32
    %c0_i32_1 = arith.constant 0 : i32
    return %c0_i32, %c0_i32_0 : i32, i32
  }
  func.func @transform_2(%arg0: i32, %arg1: i32) -> (i32, i32) {
    %c0_i32 = arith.constant 0 : i32
    %c0_i32_0 = arith.constant 0 : i32
    %c0_i32_1 = arith.constant 0 : i32
    return %c0_i32, %c0_i32_0 : i32, i32
  }
  func.func @transform_3(%arg0: i32, %arg1: i32) -> (i32, i32) {
    %c0_i32 = arith.constant 0 : i32
    %c0_i32_0 = arith.constant 0 : i32
    %c0_i32_1 = arith.constant 0 : i32
    return %c0_i32, %c0_i32_0 : i32, i32
  }
  func.func @transform_4(%arg0: i32, %arg1: i32) -> (i32, i32) {
    %c0_i32 = arith.constant 0 : i32
    %c0_i32_0 = arith.constant 0 : i32
    %c0_i32_1 = arith.constant 0 : i32
    return %c0_i32, %c0_i32_0 : i32, i32
  }
  func.func @transform_5(%arg0: i32, %arg1: i32) -> (i32, i32) {
    %c0_i32 = arith.constant 0 : i32
    %c0_i32_0 = arith.constant 0 : i32
    %c0_i32_1 = arith.constant 0 : i32
    return %c0_i32, %c0_i32_0 : i32, i32
  }
  func.func @transform_6(%arg0: i32, %arg1: i32) -> (i32, i32) {
    %c0_i32 = arith.constant 0 : i32
    %c0_i32_0 = arith.constant 0 : i32
    %c0_i32_1 = arith.constant 0 : i32
    return %c0_i32, %c0_i32_0 : i32, i32
  }
  func.func @transform_7(%arg0: i32, %arg1: i32) -> (i32, i32) {
    %c0_i32 = arith.constant 0 : i32
    %c0_i32_0 = arith.constant 0 : i32
    %c0_i32_1 = arith.constant 0 : i32
    return %c0_i32, %c0_i32_0 : i32, i32
  }
  func.func @transform_8(%arg0: i32, %arg1: i32) -> (i32, i32) {
    %c0_i32 = arith.constant 0 : i32
    %c0_i32_0 = arith.constant 0 : i32
    %c0_i32_1 = arith.constant 0 : i32
    return %c0_i32, %c0_i32_0 : i32, i32
  }
  func.func @transform_9(%arg0: i32, %arg1: i32) -> (i32, i32) {
    %c0_i32 = arith.constant 0 : i32
    %c0_i32_0 = arith.constant 0 : i32
    %c0_i32_1 = arith.constant 0 : i32
    return %c0_i32, %c0_i32_0 : i32, i32
  }
  func.func @transform_10(%arg0: i32, %arg1: i32) -> (i32, i32) {
    %c0_i32 = arith.constant 0 : i32
    %c0_i32_0 = arith.constant 0 : i32
    return %c0_i32, %arg1 : i32, i32
  }
  func.func @transform_11(%arg0: i32, %arg1: i32) -> (i32, i32) {
    %c0_i32 = arith.constant 0 : i32
    %c0_i32_0 = arith.constant 0 : i32
    return %c0_i32, %arg1 : i32, i32
  }
  func.func @transform_12(%arg0: i32, %arg1: i32) -> (i32, i32) {
    %c0_i32 = arith.constant 0 : i32
    %c0_i32_0 = arith.constant 0 : i32
    return %arg1, %c0_i32 : i32, i32
  }
  func.func @transform_13(%arg0: i32, %arg1: i32) -> (i32, i32) {
    %c0_i32 = arith.constant 0 : i32
    %c0_i32_0 = arith.constant 0 : i32
    %c0_i32_1 = arith.constant 0 : i32
    return %c0_i32, %c0_i32_0 : i32, i32
  }
  func.func @transform_14(%arg0: i32, %arg1: i32) -> (i32, i32, i32) {
    %c0_i32 = arith.constant 0 : i32
    %c0_i32_0 = arith.constant 0 : i32
    %c0_i32_1 = arith.constant 0 : i32
    return %arg0, %c0_i32, %c0_i32_0 : i32, i32, i32
  }
}

</mosaic_0001>

<llo_original>
// kernel: tpu_custom_call.1
$region0: #{tpu_custom_call.1}
  #allocation0 [shape = 'u32[]', space=smem, size = 0x4, offset = 0x4, fixed_abs, tag = 'smem constant byte address 0x4 - core index']
  #allocation1 [shape = 'u32[72,128]{1,0:T(1,128)}', space=vmem, size = 0x9000, scoped, tag = 'internal scratch']
  #allocation2 [shape = 'f32[8,32]{1,0:T(8,128)}', space=vmem, size = 0x1000, scoped, tag = 'scratch operand']
  #allocation3 [shape = 'bf16[8,32]{1,0:T(8,128)(2,1)}', space=vmem, size = 0x800, scoped, tag = 'scratch operand']
  #allocation4 [shape = 'f32[8,32]{1,0:T(8,128)}', space=vmem, size = 0x1000, scoped, tag = 'scratch operand']
  %s0 = inlined_call_operand.hbm [shape: bf16[2,8,32], index: 0, kind: input, shape index: {}, may-alias: {0,14}]
  %s1 = inlined_call_operand.vmem [shape: f32[8,8], index: 1, kind: input, shape index: {}]
  %s2 = inlined_call_operand.vmem [shape: f32[1,32], index: 2, kind: input, shape index: {}]
  %s3 = inlined_call_operand.vmem [shape: f32[1,32], index: 3, kind: input, shape index: {}]
  %s4 = inlined_call_operand.vmem [shape: bf16[32,96], index: 4, kind: input, shape index: {}]
  %s5 = inlined_call_operand.vmem [shape: f32[1,96], index: 5, kind: input, shape index: {}]
  %s6 = inlined_call_operand.vmem [shape: bf16[32,32], index: 6, kind: input, shape index: {}]
  %s7 = inlined_call_operand.vmem [shape: f32[1,32], index: 7, kind: input, shape index: {}]
  %s8 = inlined_call_operand.vmem [shape: f32[1,32], index: 8, kind: input, shape index: {}]
  %s9 = inlined_call_operand.vmem [shape: f32[1,32], index: 9, kind: input, shape index: {}]
  %s10 = inlined_call_operand.vmem [shape: bf16[32,128], index: 10, kind: input, shape index: {}]
  %s11 = inlined_call_operand.vmem [shape: f32[1,128], index: 11, kind: input, shape index: {}]
  %s12 = inlined_call_operand.vmem [shape: bf16[128,32], index: 12, kind: input, shape index: {}]
  %s13 = inlined_call_operand.vmem [shape: f32[1,32], index: 13, kind: input, shape index: {}]
  %s14 = inlined_call_operand.hbm [shape: bf16[2,8,32], index: 14, kind: output, shape index: {}, may-alias: {0,14}]
  %s15 = sld [smem:[#allocation0]]
  $region101: #{tpu_custom_call.1} parent=0
    _
  %s17 = ssub.s32 1, %s15
  %s18 = scalar_select 0, %s17, %s15
  $region1: #{tpu_custom_call.1} parent=0
    #allocation5 [shape = 'u8[4096]{0}', space=vmem, size = 0x1000, scoped, tag = 'input window, operand 0']
    #allocation6 [shape = 's32[2]{0}', space=sflag, size = 0x8, scoped, tag = 'scoped memory for tpu_custom_call.1']
    #allocation7 [shape = 's32[2]{0}', space=sflag, size = 0x8, scoped, tag = 'scoped memory for tpu_custom_call.1']
    #allocation8 [shape = 'u8[4096]{0}', space=vmem, size = 0x1000, scoped, tag = 'output window, operand 0']
    %19 = vsyncpa [#allocation6], 0
    %s20 = scalar_lea.sflag [#allocation6], 1
    %21 = vsyncpa %s20, 0
    %22 = vsyncpa [#allocation7], 0
    %s23 = scalar_lea.sflag [#allocation7], 1
    %24 = vsyncpa %s23, 0
    loop: start=0, step=1, limit=4
    $region2: #{tpu_custom_call.1} parent=1 // loop_pre_header
      _
    $region3: #{tpu_custom_call.1} parent=1 // loop_header
      %s26 = sphi 0, %s30
      %p27 = scmp.ge.s32.totalorder %s26, 4
      %s33 = sphi 0, %s45
      %s34 = sphi 0, %s41
      %s35 = sphi 0, %s33
      %s36 = sphi 0, %s34
      %s37 = sphi 0, %s35
      %s38 = sphi 0, %s36
      %s48 = sphi 0, %s50
      %s51 = sphi 0, %s48
      %s52 = sphi 0, %s51
      %s68 = sphi 0, %s52
      %s72 = sphi 0, %s72
      %s74 = sphi 0, %s72
      %s75 = sphi 0, %s74
      %s89 = sphi 0, %s75
      %s93 = sphi 0, %s93
      %s95 = sphi 0, %s93
      %s96 = sphi 0, %s95
      %s110 = sphi 0, %s96
      %s114 = sphi 0, %s114
      %s116 = sphi 0, %s114
      %s117 = sphi 0, %s116
      %s131 = sphi 0, %s117
      %s135 = sphi 0, %s135
      %s137 = sphi 0, %s135
      %s138 = sphi 0, %s137
      %s152 = sphi 0, %s138
      %s156 = sphi 0, %s156
      %s158 = sphi 0, %s156
      %s159 = sphi 0, %s158
      %s173 = sphi 0, %s159
      %s177 = sphi 0, %s177
      %s179 = sphi 0, %s177
      %s180 = sphi 0, %s179
      %s194 = sphi 0, %s180
      %s198 = sphi 0, %s198
      %s200 = sphi 0, %s198
      %s201 = sphi 0, %s200
      %s215 = sphi 0, %s201
      %s219 = sphi 0, %s219
      %s221 = sphi 0, %s219
      %s222 = sphi 0, %s221
      %s236 = sphi 0, %s222
      %s240 = sphi 0, %s240
      %s242 = sphi 0, %s240
      %s243 = sphi 0, %s242
      %s257 = sphi 0, %s243
      %s263 = sphi 0, %s265
      %s266 = sphi 0, %s263
      %s267 = sphi 0, %s266
      %s283 = sphi 0, %s267
      %s289 = sphi 0, %s291
      %s292 = sphi 0, %s289
      %s293 = sphi 0, %s292
      %s309 = sphi 0, %s293
      %s315 = sphi 0, %s317
      %s318 = sphi 0, %s315
      %s319 = sphi 0, %s318
      %s335 = sphi 0, %s319
      %s339 = sphi 0, %s339
      %s341 = sphi 0, %s339
      %s342 = sphi 0, %s341
      %s356 = sphi 0, %s342
      %s362 = sphi 0, %s364
      %s365 = sphi 0, %s362
      %s366 = sphi 0, %s365
      %s382 = sphi 0, %s366
    $region4: #{tpu_custom_call.1} parent=1 // loop_header_branch
      %29 = sbr.rel (%p27) target = $region8
    $region5: #{tpu_custom_call.1} parent=1 // loop_body
      %s31 = ssub.s32 %s26, 1
      %s32 = ssub.s32 %s26, 2
      %s39 = sadd.s32 1, %s34
      %p40 = scmp.ge.s32.totalorder %s39, 1
      %s41 = scalar_select %p40, 0, %s39
      %s42 = sadd.s32 1, %s33
      %s43 = scalar_select %p40, %s42, %s33
      %p44 = scmp.ge.s32.totalorder %s43, 2
      %s45 = scalar_select %p44, 0, %s43
      %s46 = ssub.s32 %s33, %s45
      %p47 = scmp.eq.s32.totalorder %s46, 0
      %s49 = sadd.s32 %s48, 1
      %s50 = scalar_select %p47, %s48, %s49
      %p53 = pneg %p47
      %p54 = scmp.eq.s32.totalorder %s26, 1
      %p55 = por %p53, %p54
      %p56 = scmp.ne.s32.totalorder %s48, %s51
      %p57 = scmp.eq.s32.totalorder %s26, 0
      %p58 = por %p56, %p57
      %p59 = scmp.ne.s32.totalorder %s48, %s51
      %p60 = scmp.eq.s32.totalorder %s31, 1
      %p61 = por %p59, %p60
      %p62 = scmp.ne.s32.totalorder %s51, %s52
      %p63 = scmp.eq.s32.totalorder %s31, 0
      %p64 = por %p62, %p63
      %p65 = scmp.ne.s32.totalorder %s51, %s52
      %p66 = scmp.eq.s32.totalorder %s32, 1
      %p67 = por %p65, %p66
      %p69 = scmp.ne.s32.totalorder %s52, %s68
      %p70 = scmp.eq.s32.totalorder %s32, 0
      %p71 = por %p69, %p70
      %s73 = sadd.s32 %s72, 1
      %p76 = scmp.eq.s32.totalorder %s26, 1
      %p77 = scmp.ne.s32.totalorder %s72, %s74
      %p78 = scmp.eq.s32.totalorder %s26, 0
      %p79 = por %p77, %p78
      %p80 = scmp.ne.s32.totalorder %s72, %s74
      %p81 = scmp.eq.s32.totalorder %s31, 1
      %p82 = por %p80, %p81
      %p83 = scmp.ne.s32.totalorder %s74, %s75
      %p84 = scmp.eq.s32.totalorder %s31, 0
      %p85 = por %p83, %p84
      %p86 = scmp.ne.s32.totalorder %s74, %s75
      %p87 = scmp.eq.s32.totalorder %s32, 1
      %p88 = por %p86, %p87
      %p90 = scmp.ne.s32.totalorder %s75, %s89
      %p91 = scmp.eq.s32.totalorder %s32, 0
      %p92 = por %p90, %p91
      %s94 = sadd.s32 %s93, 1
      %p97 = scmp.eq.s32.totalorder %s26, 1
      %p98 = scmp.ne.s32.totalorder %s93, %s95
      %p99 = scmp.eq.s32.totalorder %s26, 0
      %p100 = por %p98, %p99
      %p101 = scmp.ne.s32.totalorder %s93, %s95
      %p102 = scmp.eq.s32.totalorder %s31, 1
      %p103 = por %p101, %p102
      %p104 = scmp.ne.s32.totalorder %s95, %s96
      %p105 = scmp.eq.s32.totalorder %s31, 0
      %p106 = por %p104, %p105
      %p107 = scmp.ne.s32.totalorder %s95, %s96
      %p108 = scmp.eq.s32.totalorder %s32, 1
      %p109 = por %p107, %p108
      %p111 = scmp.ne.s32.totalorder %s96, %s110
      %p112 = scmp.eq.s32.totalorder %s32, 0
      %p113 = por %p111, %p112
      %s115 = sadd.s32 %s114, 1
      %p118 = scmp.eq.s32.totalorder %s26, 1
      %p119 = scmp.ne.s32.totalorder %s114, %s116
      %p120 = scmp.eq.s32.totalorder %s26, 0
      %p121 = por %p119, %p120
      %p122 = scmp.ne.s32.totalorder %s114, %s116
      %p123 = scmp.eq.s32.totalorder %s31, 1
      %p124 = por %p122, %p123
      %p125 = scmp.ne.s32.totalorder %s116, %s117
      %p126 = scmp.eq.s32.totalorder %s31, 0
      %p127 = por %p125, %p126
      %p128 = scmp.ne.s32.totalorder %s116, %s117
      %p129 = scmp.eq.s32.totalorder %s32, 1
      %p130 = por %p128, %p129
      %p132 = scmp.ne.s32.totalorder %s117, %s131
      %p133 = scmp.eq.s32.totalorder %s32, 0
      %p134 = por %p132, %p133
      %s136 = sadd.s32 %s135, 1
      %p139 = scmp.eq.s32.totalorder %s26, 1
      %p140 = scmp.ne.s32.totalorder %s135, %s137
      %p141 = scmp.eq.s32.totalorder %s26, 0
      %p142 = por %p140, %p141
      %p143 = scmp.ne.s32.totalorder %s135, %s137
      %p144 = scmp.eq.s32.totalorder %s31, 1
      %p145 = por %p143, %p144
      %p146 = scmp.ne.s32.totalorder %s137, %s138
      %p147 = scmp.eq.s32.totalorder %s31, 0
      %p148 = por %p146, %p147
      %p149 = scmp.ne.s32.totalorder %s137, %s138
      %p150 = scmp.eq.s32.totalorder %s32, 1
      %p151 = por %p149, %p150
      %p153 = scmp.ne.s32.totalorder %s138, %s152
      %p154 = scmp.eq.s32.totalorder %s32, 0
      %p155 = por %p153, %p154
      %s157 = sadd.s32 %s156, 1
      %p160 = scmp.eq.s32.totalorder %s26, 1
      %p161 = scmp.ne.s32.totalorder %s156, %s158
      %p162 = scmp.eq.s32.totalorder %s26, 0
      %p163 = por %p161, %p162
      %p164 = scmp.ne.s32.totalorder %s156, %s158
      %p165 = scmp.eq.s32.totalorder %s31, 1
      %p166 = por %p164, %p165
      %p167 = scmp.ne.s32.totalorder %s158, %s159
      %p168 = scmp.eq.s32.totalorder %s31, 0
      %p169 = por %p167, %p168
      %p170 = scmp.ne.s32.totalorder %s158, %s159
      %p171 = scmp.eq.s32.totalorder %s32, 1
      %p172 = por %p170, %p171
      %p174 = scmp.ne.s32.totalorder %s159, %s173
      %p175 = scmp.eq.s32.totalorder %s32, 0
      %p176 = por %p174, %p175
      %s178 = sadd.s32 %s177, 1
      %p181 = scmp.eq.s32.totalorder %s26, 1
      %p182 = scmp.ne.s32.totalorder %s177, %s179
      %p183 = scmp.eq.s32.totalorder %s26, 0
      %p184 = por %p182, %p183
      %p185 = scmp.ne.s32.totalorder %s177, %s179
      %p186 = scmp.eq.s32.totalorder %s31, 1
      %p187 = por %p185, %p186
      %p188 = scmp.ne.s32.totalorder %s179, %s180
      %p189 = scmp.eq.s32.totalorder %s31, 0
      %p190 = por %p188, %p189
      %p191 = scmp.ne.s32.totalorder %s179, %s180
      %p192 = scmp.eq.s32.totalorder %s32, 1
      %p193 = por %p191, %p192
      %p195 = scmp.ne.s32.totalorder %s180, %s194
      %p196 = scmp.eq.s32.totalorder %s32, 0
      %p197 = por %p195, %p196
      %s199 = sadd.s32 %s198, 1
      %p202 = scmp.eq.s32.totalorder %s26, 1
      %p203 = scmp.ne.s32.totalorder %s198, %s200
      %p204 = scmp.eq.s32.totalorder %s26, 0
      %p205 = por %p203, %p204
      %p206 = scmp.ne.s32.totalorder %s198, %s200
      %p207 = scmp.eq.s32.totalorder %s31, 1
      %p208 = por %p206, %p207
      %p209 = scmp.ne.s32.totalorder %s200, %s201
      %p210 = scmp.eq.s32.totalorder %s31, 0
      %p211 = por %p209, %p210
      %p212 = scmp.ne.s32.totalorder %s200, %s201
      %p213 = scmp.eq.s32.totalorder %s32, 1
      %p214 = por %p212, %p213
      %p216 = scmp.ne.s32.totalorder %s201, %s215
      %p217 = scmp.eq.s32.totalorder %s32, 0
      %p218 = por %p216, %p217
      %s220 = sadd.s32 %s219, 1
      %p223 = scmp.eq.s32.totalorder %s26, 1
      %p224 = scmp.ne.s32.totalorder %s219, %s221
      %p225 = scmp.eq.s32.totalorder %s26, 0
      %p226 = por %p224, %p225
      %p227 = scmp.ne.s32.totalorder %s219, %s221
      %p228 = scmp.eq.s32.totalorder %s31, 1
      %p229 = por %p227, %p228
      %p230 = scmp.ne.s32.totalorder %s221, %s222
      %p231 = scmp.eq.s32.totalorder %s31, 0
      %p232 = por %p230, %p231
      %p233 = scmp.ne.s32.totalorder %s221, %s222
      %p234 = scmp.eq.s32.totalorder %s32, 1
      %p235 = por %p233, %p234
      %p237 = scmp.ne.s32.totalorder %s222, %s236
      %p238 = scmp.eq.s32.totalorder %s32, 0
      %p239 = por %p237, %p238
      %s241 = sadd.s32 %s240, 1
      %p244 = scmp.eq.s32.totalorder %s26, 1
      %p245 = scmp.ne.s32.totalorder %s240, %s242
      %p246 = scmp.eq.s32.totalorder %s26, 0
      %p247 = por %p245, %p246
      %p248 = scmp.ne.s32.totalorder %s240, %s242
      %p249 = scmp.eq.s32.totalorder %s31, 1
      %p250 = por %p248, %p249
      %p251 = scmp.ne.s32.totalorder %s242, %s243
      %p252 = scmp.eq.s32.totalorder %s31, 0
      %p253 = por %p251, %p252
      %p254 = scmp.ne.s32.totalorder %s242, %s243
      %p255 = scmp.eq.s32.totalorder %s32, 1
      %p256 = por %p254, %p255
      %p258 = scmp.ne.s32.totalorder %s243, %s257
      %p259 = scmp.eq.s32.totalorder %s32, 0
      %p260 = por %p258, %p259
      %s261 = ssub.s32 %s34, %s41
      %p262 = scmp.eq.s32.totalorder %s261, 0
      %s264 = sadd.s32 %s263, 1
      %s265 = scalar_select %p262, %s263, %s264
      %p268 = pneg %p262
      %p269 = scmp.eq.s32.totalorder %s26, 1
      %p270 = por %p268, %p269
      %p271 = scmp.ne.s32.totalorder %s263, %s266
      %p272 = scmp.eq.s32.totalorder %s26, 0
      %p273 = por %p271, %p272
      %p274 = scmp.ne.s32.totalorder %s263, %s266
      %p275 = scmp.eq.s32.totalorder %s31, 1
      %p276 = por %p274, %p275
      %p277 = scmp.ne.s32.totalorder %s266, %s267
      %p278 = scmp.eq.s32.totalorder %s31, 0
      %p279 = por %p277, %p278
      %p280 = scmp.ne.s32.totalorder %s266, %s267
      %p281 = scmp.eq.s32.totalorder %s32, 1
      %p282 = por %p280, %p281
      %p284 = scmp.ne.s32.totalorder %s267, %s283
      %p285 = scmp.eq.s32.totalorder %s32, 0
      %p286 = por %p284, %p285
      %s287 = ssub.s32 %s34, %s41
      %p288 = scmp.eq.s32.totalorder %s287, 0
      %s290 = sadd.s32 %s289, 1
      %s291 = scalar_select %p288, %s289, %s290
      %p294 = pneg %p288
      %p295 = scmp.eq.s32.totalorder %s26, 1
      %p296 = por %p294, %p295
      %p297 = scmp.ne.s32.totalorder %s289, %s292
      %p298 = scmp.eq.s32.totalorder %s26, 0
      %p299 = por %p297, %p298
      %p300 = scmp.ne.s32.totalorder %s289, %s292
      %p301 = scmp.eq.s32.totalorder %s31, 1
      %p302 = por %p300, %p301
      %p303 = scmp.ne.s32.totalorder %s292, %s293
      %p304 = scmp.eq.s32.totalorder %s31, 0
      %p305 = por %p303, %p304
      %p306 = scmp.ne.s32.totalorder %s292, %s293
      %p307 = scmp.eq.s32.totalorder %s32, 1
      %p308 = por %p306, %p307
      %p310 = scmp.ne.s32.totalorder %s293, %s309
      %p311 = scmp.eq.s32.totalorder %s32, 0
      %p312 = por %p310, %p311
      %s313 = ssub.s32 %s34, %s41
      %p314 = scmp.eq.s32.totalorder %s313, 0
      %s316 = sadd.s32 %s315, 1
      %s317 = scalar_select %p314, %s315, %s316
      %p320 = pneg %p314
      %p321 = scmp.eq.s32.totalorder %s26, 1
      %p322 = por %p320, %p321
      %p323 = scmp.ne.s32.totalorder %s315, %s318
      %p324 = scmp.eq.s32.totalorder %s26, 0
      %p325 = por %p323, %p324
      %p326 = scmp.ne.s32.totalorder %s315, %s318
      %p327 = scmp.eq.s32.totalorder %s31, 1
      %p328 = por %p326, %p327
      %p329 = scmp.ne.s32.totalorder %s318, %s319
      %p330 = scmp.eq.s32.totalorder %s31, 0
      %p331 = por %p329, %p330
      %p332 = scmp.ne.s32.totalorder %s318, %s319
      %p333 = scmp.eq.s32.totalorder %s32, 1
      %p334 = por %p332, %p333
      %p336 = scmp.ne.s32.totalorder %s319, %s335
      %p337 = scmp.eq.s32.totalorder %s32, 0
      %p338 = por %p336, %p337
      %s340 = sadd.s32 %s339, 1
      %p343 = scmp.eq.s32.totalorder %s26, 1
      %p344 = scmp.ne.s32.totalorder %s339, %s341
      %p345 = scmp.eq.s32.totalorder %s26, 0
      %p346 = por %p344, %p345
      %p347 = scmp.ne.s32.totalorder %s339, %s341
      %p348 = scmp.eq.s32.totalorder %s31, 1
      %p349 = por %p347, %p348
      %p350 = scmp.ne.s32.totalorder %s341, %s342
      %p351 = scmp.eq.s32.totalorder %s31, 0
      %p352 = por %p350, %p351
      %p353 = scmp.ne.s32.totalorder %s341, %s342
      %p354 = scmp.eq.s32.totalorder %s32, 1
      %p355 = por %p353, %p354
      %p357 = scmp.ne.s32.totalorder %s342, %s356
      %p358 = scmp.eq.s32.totalorder %s32, 0
      %p359 = por %p357, %p358
      %s360 = ssub.s32 %s33, %s45
      %p361 = scmp.eq.s32.totalorder %s360, 0
      %s363 = sadd.s32 %s362, 1
      %s364 = scalar_select %p361, %s362, %s363
      %p367 = pneg %p361
      %p368 = scmp.eq.s32.totalorder %s26, 1
      %p369 = por %p367, %p368
      %p370 = scmp.ne.s32.totalorder %s362, %s365
      %p371 = scmp.eq.s32.totalorder %s26, 0
      %p372 = por %p370, %p371
      %p373 = scmp.ne.s32.totalorder %s362, %s365
      %p374 = scmp.eq.s32.totalorder %s31, 1
      %p375 = por %p373, %p374
      %p376 = scmp.ne.s32.totalorder %s365, %s366
      %p377 = scmp.eq.s32.totalorder %s31, 0
      %p378 = por %p376, %p377
      %p379 = scmp.ne.s32.totalorder %s365, %s366
      %p380 = scmp.eq.s32.totalorder %s32, 1
      %p381 = por %p379, %p380
      %p383 = scmp.ne.s32.totalorder %s366, %s382
      %p384 = scmp.eq.s32.totalorder %s32, 0
      %p385 = por %p383, %p384
      %p386 = scmp.le.s32.totalorder 1, %s26
      %p387 = scmp.lt.s32.totalorder %s26, 3
      %p388 = pnand %p386, %p387
      %p389 = pneg %p388
      // Predicated region
      $region9: #{tpu_custom_call.1} parent=5 // pred_check
        _
      $region10: #{tpu_custom_call.1} parent=5 // pred_check_branch
        %391 = sbr.rel (%p388) target = $region12
      $region11: #{tpu_custom_call.1} parent=5 // pred_region
        %s392 = ssub.s32 %s26, 1
        // Predicated region
        $region13: #{tpu_custom_call.1} parent=11 // pred_check
          %p393 = pneg %p85
        $region14: #{tpu_custom_call.1} parent=11 // pred_check_branch
          %395 = sbr.rel (%p393) target = $region16
        $region15: #{tpu_custom_call.1} parent=11 // pred_region
          _
        $region16: #{tpu_custom_call.1} parent=11 // pred_fallthru
          _
        // Predicated region
        $region17: #{tpu_custom_call.1} parent=11 // pred_check
          %p396 = pneg %p106
        $region18: #{tpu_custom_call.1} parent=11 // pred_check_branch
          %398 = sbr.rel (%p396) target = $region20
        $region19: #{tpu_custom_call.1} parent=11 // pred_region
          _
        $region20: #{tpu_custom_call.1} parent=11 // pred_fallthru
          _
        // Predicated region
        $region21: #{tpu_custom_call.1} parent=11 // pred_check
          %p399 = pneg %p127
        $region22: #{tpu_custom_call.1} parent=11 // pred_check_branch
          %401 = sbr.rel (%p399) target = $region24
        $region23: #{tpu_custom_call.1} parent=11 // pred_region
          _
        $region24: #{tpu_custom_call.1} parent=11 // pred_fallthru
          _
        // Predicated region
        $region25: #{tpu_custom_call.1} parent=11 // pred_check
          %p402 = pneg %p148
        $region26: #{tpu_custom_call.1} parent=11 // pred_check_branch
          %404 = sbr.rel (%p402) target = $region28
        $region27: #{tpu_custom_call.1} parent=11 // pred_region
          _
        $region28: #{tpu_custom_call.1} parent=11 // pred_fallthru
          _
        // Predicated region
        $region29: #{tpu_custom_call.1} parent=11 // pred_check
          %p405 = pneg %p169
        $region30: #{tpu_custom_call.1} parent=11 // pred_check_branch
          %407 = sbr.rel (%p405) target = $region32
        $region31: #{tpu_custom_call.1} parent=11 // pred_region
          _
        $region32: #{tpu_custom_call.1} parent=11 // pred_fallthru
          _
        // Predicated region
        $region33: #{tpu_custom_call.1} parent=11 // pred_check
          %p408 = pneg %p190
        $region34: #{tpu_custom_call.1} parent=11 // pred_check_branch
          %410 = sbr.rel (%p408) target = $region36
        $region35: #{tpu_custom_call.1} parent=11 // pred_region
          _
        $region36: #{tpu_custom_call.1} parent=11 // pred_fallthru
          _
        // Predicated region
        $region37: #{tpu_custom_call.1} parent=11 // pred_check
          %p411 = pneg %p211
        $region38: #{tpu_custom_call.1} parent=11 // pred_check_branch
          %413 = sbr.rel (%p411) target = $region40
        $region39: #{tpu_custom_call.1} parent=11 // pred_region
          _
        $region40: #{tpu_custom_call.1} parent=11 // pred_fallthru
          _
        // Predicated region
        $region41: #{tpu_custom_call.1} parent=11 // pred_check
          %p414 = pneg %p232
        $region42: #{tpu_custom_call.1} parent=11 // pred_check_branch
          %416 = sbr.rel (%p414) target = $region44
        $region43: #{tpu_custom_call.1} parent=11 // pred_region
          _
        $region44: #{tpu_custom_call.1} parent=11 // pred_fallthru
          _
        // Predicated region
        $region45: #{tpu_custom_call.1} parent=11 // pred_check
          %p417 = pneg %p253
        $region46: #{tpu_custom_call.1} parent=11 // pred_check_branch
          %419 = sbr.rel (%p417) target = $region48
        $region47: #{tpu_custom_call.1} parent=11 // pred_region
          _
        $region48: #{tpu_custom_call.1} parent=11 // pred_fallthru
          _
        // Predicated region
        $region49: #{tpu_custom_call.1} parent=11 // pred_check
          %p420 = pneg %p279
        $region50: #{tpu_custom_call.1} parent=11 // pred_check_branch
          %422 = sbr.rel (%p420) target = $region52
        $region51: #{tpu_custom_call.1} parent=11 // pred_region
          %p423 = scmp.lt.s32.totalorder %s36, 0
          %s424 = scalar_select %p423, %s36, 0
          %s425 = smul.addr %s424, 4
          %s426 = scalar_lea.vmem %s10, %s425
        $region52: #{tpu_custom_call.1} parent=11 // pred_fallthru
          _
        // Predicated region
        $region53: #{tpu_custom_call.1} parent=11 // pred_check
          %p427 = pneg %p305
        $region54: #{tpu_custom_call.1} parent=11 // pred_check_branch
          %429 = sbr.rel (%p427) target = $region56
        $region55: #{tpu_custom_call.1} parent=11 // pred_region
          %p430 = scmp.lt.s32.totalorder %s36, 0
          %s431 = scalar_select %p430, %s36, 0
          %s432 = scalar_lea.vmem %s11, %s431
        $region56: #{tpu_custom_call.1} parent=11 // pred_fallthru
          _
        // Predicated region
        $region57: #{tpu_custom_call.1} parent=11 // pred_check
          %p433 = pneg %p331
        $region58: #{tpu_custom_call.1} parent=11 // pred_check_branch
          %435 = sbr.rel (%p433) target = $region60
        $region59: #{tpu_custom_call.1} parent=11 // pred_region
          %s436 = smul.u32 16, %s36
          %p437 = scmp.lt.s32.totalorder %s436, 15
          %s438 = scalar_select %p437, %s436, 15
          %s439 = smul.addr %s438, 4
          %s440 = scalar_lea.vmem %s12, %s439
          %s441 = smul.u32 16, %s36
        $region60: #{tpu_custom_call.1} parent=11 // pred_fallthru
          _
        // Predicated region
        $region61: #{tpu_custom_call.1} parent=11 // pred_check
          %p442 = pneg %p352
        $region62: #{tpu_custom_call.1} parent=11 // pred_check_branch
          %444 = sbr.rel (%p442) target = $region64
        $region63: #{tpu_custom_call.1} parent=11 // pred_region
          _
        $region64: #{tpu_custom_call.1} parent=11 // pred_fallthru
          _
      $region12: #{tpu_custom_call.1} parent=5 // pred_fallthru
        _
      %p445 = scmp.lt.s32.totalorder %s26, 2
      // Predicated region
      $region65: #{tpu_custom_call.1} parent=5 // pred_check
        %p446 = pneg %p445
      $region66: #{tpu_custom_call.1} parent=5 // pred_check_branch
        %448 = sbr.rel (%p446) target = $region68
      $region67: #{tpu_custom_call.1} parent=5 // pred_region
        // Predicated region
        $region69: #{tpu_custom_call.1} parent=67 // pred_check
          %p449 = pneg %p58
        $region70: #{tpu_custom_call.1} parent=67 // pred_check_branch
          %451 = sbr.rel (%p449) target = $region72
        $region71: #{tpu_custom_call.1} parent=67 // pred_region
          %s452 = sand.u32 %s48, 1
          %s453 = scalar_lea.sflag [#allocation6], %s452
          %s454 = sand.u32 %s48, 1
          %s455 = smul.addr %s454, 4
          %s456 = scalar_lea.vmem [#allocation5], %s455
          %458 = vsyncadd %s453, 0
          %s459 = smul.addr %s33, 4
          %s460 = scalar_lea.hbm %s0, %s459
          %s462 = sshll.u32 %s460, 4
          %s463 = int_to_ptr.hbm [resolvable:$true] %s462
          %s464 = sshll.u32 %s456, 4
          %s465 = int_to_ptr.vmem [resolvable:$true] %s464
          %467 = dma.hbm_to_vmem [thread:$0]  %s463, 64, %s465, %s453
        $region72: #{tpu_custom_call.1} parent=67 // pred_fallthru
          _
      $region68: #{tpu_custom_call.1} parent=5 // pred_fallthru
        _
      %p468 = scmp.le.s32.totalorder 1, %s26
      %p469 = scmp.lt.s32.totalorder %s26, 3
      %p470 = pnand %p468, %p469
      %p471 = pneg %p470
      // Predicated region
      $region73: #{tpu_custom_call.1} parent=5 // pred_check
        _
      $region74: #{tpu_custom_call.1} parent=5 // pred_check_branch
        %473 = sbr.rel (%p470) target = $region76
      $region75: #{tpu_custom_call.1} parent=5 // pred_region
        %s474 = ssub.s32 %s26, 1
        %s475 = sand.u32 %s51, 1
        %s476 = scalar_lea.sflag [#allocation6], %s475
        %s477 = sand.u32 %s51, 1
        %s478 = smul.addr %s477, 4
        %s479 = scalar_lea.vmem [#allocation5], %s478
        // Predicated region
        $region77: #{tpu_custom_call.1} parent=75 // pred_check
          %p480 = pneg %p64
        $region78: #{tpu_custom_call.1} parent=75 // pred_check_branch
          %482 = sbr.rel (%p480) target = $region80
        $region79: #{tpu_custom_call.1} parent=75 // pred_region
          %484 = dma.done %s476, 64
        $region80: #{tpu_custom_call.1} parent=75 // pred_fallthru
          _
        %s485 = sand.u32 %s51, 1
        %s486 = scalar_lea.sflag [#allocation6], %s485
        %s487 = sand.u32 %s51, 1
        %s488 = smul.addr %s487, 4
        %s489 = scalar_lea.vmem [#allocation5], %s488
        %p490 = pneg %p64
        %p491 = pneg %p61
        %p492 = pneg %p85
        %p493 = pneg %p82
        %p494 = pneg %p106
        %p495 = pneg %p103
        %p496 = pneg %p127
        %p497 = pneg %p124
        %p498 = pneg %p148
        %p499 = pneg %p145
        %p500 = pneg %p169
        %p501 = pneg %p166
        %p502 = pneg %p190
        %p503 = pneg %p187
        %p504 = pneg %p211
        %p505 = pneg %p208
        %p506 = pneg %p232
        %p507 = pneg %p229
        %p508 = pneg %p253
        %p509 = pneg %p250
        %p510 = scmp.lt.s32.totalorder %s36, 0
        %s511 = scalar_select %p510, %s36, 0
        %s512 = smul.addr %s511, 4
        %s513 = scalar_lea.vmem %s10, %s512
        %p514 = pneg %p279
        %p515 = pneg %p276
        %p516 = scmp.lt.s32.totalorder %s36, 0
        %s517 = scalar_select %p516, %s36, 0
        %s518 = scalar_lea.vmem %s11, %s517
        %p519 = pneg %p305
        %p520 = pneg %p302
        %s521 = smul.u32 16, %s36
        %p522 = scmp.lt.s32.totalorder %s521, 15
        %s523 = scalar_select %p522, %s521, 15
        %s524 = smul.addr %s523, 4
        %s525 = scalar_lea.vmem %s12, %s524
        %p526 = pneg %p331
        %p527 = pneg %p328
        %p528 = pneg %p352
        %p529 = pneg %p349
        %p530 = pneg %p378
        %p531 = pneg %p375
        %s532 = sand.u32 %s365, 1
        %s533 = scalar_lea.sflag [#allocation7], %s532
        %s534 = sand.u32 %s365, 1
        %s535 = smul.addr %s534, 4
        %s536 = scalar_lea.vmem [#allocation8], %s535
        %p537 = scmp.lt.s32.totalorder %s36, 0
        %s538 = scalar_select %p537, %s36, 0
        %s539 = smul.addr %s538, 4
        %s540 = scalar_lea.vmem %s10, %s539
        %p541 = scmp.lt.s32.totalorder %s36, 0
        %s542 = scalar_select %p541, %s36, 0
        %s543 = scalar_lea.vmem %s11, %s542
        %s544 = smul.u32 16, %s36
        %p545 = scmp.lt.s32.totalorder %s544, 15
        %s546 = scalar_select %p545, %s544, 15
        %s547 = smul.addr %s546, 4
        %s548 = scalar_lea.vmem %s12, %s547
        %s549 = smul.u32 16, %s36
        %p551 = scmp.eq.s32.totalorder %s36, 0
        // Predicated region
        $region81: #{tpu_custom_call.1} parent=75 // pred_check
          %p552 = pneg %p551
        $region82: #{tpu_custom_call.1} parent=75 // pred_check_branch
          %554 = sbr.rel (%p552) target = $region84
        $region83: #{tpu_custom_call.1} parent=75 // pred_region
          %v555 = vld [vmem:[%s479] sm:$0xf]
          %v556 = vunpack.c.l.bf16 %v555
          %v557 = vld [vmem:[%s2] sm:$0x1]
          %v558 = vld [vmem:[%s3] sm:$0x1]
          %vm559 = vcmask 261120
          %v560 = vsel %vm559, %v556, 0.0
          %561 = vadd.xlane.f32.xlu0 %v560
          %v562 = vpop.xlane.xlu0 %561
          %v563 = vrcp.pop 32.0
          %v564 = vmul.f32 32.0, %v563
          %v565 = vsub.f32 1.0, %v564
          %v566 = vmul.f32 %v563, %v565
          %v567 = vadd.f32 %v563, %v566
          %vm568 = vweird.f32 %v563
          %v569 = vsel %vm568, %v563, %v567
          %v570 = vmul.f32 %v562, %v569
          %v571 = vsub.f32 %v556, %v570
          %v572 = vmul.f32 %v571, %v571
          %v573 = vsel %vm559, %v572, 0.0
          %574 = vadd.xlane.f32.xlu0 %v573
          %v575 = vpop.xlane.xlu0 %574
          %v576 = vmul.f32 %v575, %v569
          %v577 = vadd.f32 %v576, 1e-05
          %v578 = vrsqrt.pop %v577
          %v579 = vmul.f32 %v578, %v577
          %v580 = vmul.f32 %v579, %v578
          %v581 = vmul.f32 0.5, %v580
          %v582 = vsub.f32 1.5, %v581
          %v583 = vmul.f32 %v578, %v582
          %vm584 = vweird.f32 %v577
          %vm585 = vweird.f32 %v578
          %vm586 = vmor %vm584, %vm585
          %v587 = vsel %vm586, %v578, %v583
          %v588 = vmul.f32 %v571, %v587
          %v590 = vperm.slane %v557, 0
          %v592 = vmul.f32 %v588, %v590
          %v594 = vperm.slane %v558, 0
          %v596 = vadd.f32 %v592, %v594
          %v597 = vpack.c.bf16 %v596, %v596
          %v598 = vld [vmem:[%s4] sm:$0xf]
          %v599 = vld [vmem:[%s4 + $0x4] sm:$0xf]
          %v600 = vld [vmem:[%s4 + $0x8] sm:$0xf]
          %v601 = vld [vmem:[%s4 + $0xc] sm:$0xf]
          %v602 = vld [vmem:[%s5] sm:$0x1]
          %v604 = vperm.slane %v602, 0
          %v610 = vunpack.c.l.b16 %v598
          %v611 = vunpack.c.l.b16 %v599
          %v612 = vunpack.c.l.b16 %v600
          %v613 = vunpack.c.l.b16 %v601
          %v614 = vpack.c.b16 %v611, %v610
          %v615 = vpack.c.b16 %v613, %v612
          %v619 = vsel %vm559, %v597, 0
          %621 = vmatpush.bf16.msra.mxu0 0
          %622 = vmatpush.bf16.msra.mxu0 0
          %623 = vmatpush.bf16.msra.mxu0 0
          %624 = vmatpush.bf16.msra.mxu0 0
          %625 = vmatpush.bf16.msra.mxu0 0
          %626 = vmatpush.bf16.msra.mxu0 0
          %627 = vmatpush.bf16.msra.mxu0 %v615
          %628 = vmatpush.bf16.msra.mxu0 %v614
          %629 = vmatmul.bf16.gmra.mxu0 %v619
          %v630 = vpop.f32.mrf.mxu0
          %v631 = vadd.f32 %v604, %v630
          %v632 = vpop.f32.mrf.mxu0
          %633 = vdwg.mxu0
          %v634 = vmul.f32 %v631, 0.35355338
          %v635 = vpack.c.bf16 %v634, %v634
          %v636 = vpack.c.bf16 %v631, %v631
          %v637 = vld [vmem:[%s1] sm:$0xff]
          %v639 = vunpack.c.l.b16 %v636
          %v640 = vpack.c.b16 %v639, %v639
          %641 = vrot.lane.b32.xlu0 %v640, 96
          %v642 = vpop.permute.xlu0 %641
          %vm643 = vcmask 64512
          %v645 = vsel %vm643, %v635, 0
          %v648 = vsel %vm643, %v642, 0
          %650 = vmatpush.bf16.xpose.msra.mxu0 0
          %651 = vmatpush.bf16.xpose.msra.mxu0 0
          %652 = vmatpush.bf16.xpose.msra.mxu0 0
          %653 = vmatpush.bf16.xpose.msra.mxu0 0
          %654 = vmatpush.bf16.xpose.msra.mxu0 0
          %655 = vmatpush.bf16.xpose.msra.mxu0 0
          %656 = vmatpush.bf16.xpose.msra.mxu0 0
          %657 = vmatpush.bf16.xpose.msra.mxu0 %v648
          %658 = vmatmul.bf16.gmra.mxu0 %v645
          %v659 = vpop.f32.mrf.mxu0
          %v660 = vadd.f32 %v637, %v659
          %v661 = vpop.f32.mrf.mxu0
          %662 = vdwg.mxu0
          %v663 = vsel %vm643, %v660, -inf
          %664 = vmax.xlane.f32.xlu0 %v663
          %v665 = vpop.xlane.xlu0 %664
          %v666 = vsub.f32 %v660, %v665
          %v667 = vmul.f32 %v666, 1.442695
          %v668 = vpow.pop %v667
          %v669 = vsel %vm643, %v668, 0.0
          %670 = vadd.xlane.f32.xlu0 %v669
          %v671 = vpop.xlane.xlu0 %670
          %v672 = vrcp.pop %v671
          %v673 = vmul.f32 %v671, %v672
          %v674 = vsub.f32 1.0, %v673
          %v675 = vmul.f32 %v672, %v674
          %v676 = vadd.f32 %v672, %v675
          %vm677 = vweird.f32 %v671
          %vm678 = vweird.f32 %v672
          %vm679 = vmor %vm677, %vm678
          %v680 = vsel %vm679, %v672, %v676
          %v681 = vand.u32 2147483647, %v671
          %vm682 = vcmp.eq.f32.partialorder %v681, 8.507059e+37
          %v683 = vand.u32 %v671, 2147483648
          %v684 = vor.u32 1.1754944e-38, %v683
          %v685 = vsel %vm682, %v684, %v680
          %v686 = vmul.f32 %v668, %v685
          %v687 = vpack.c.bf16 %v686, %v686
          %688 = vrot.lane.b32.xlu0 %v640, 64
          %v689 = vpop.permute.xlu0 %688
          %v691 = vsel %vm643, %v687, 0
          %vm693 = vcmask 1043456
          %v695 = vsel %vm693, %v689, 0
          %697 = vmatpush.bf16.msra.mxu0 0
          %698 = vmatpush.bf16.msra.mxu0 0
          %699 = vmatpush.bf16.msra.mxu0 0
          %700 = vmatpush.bf16.msra.mxu0 0
          %701 = vmatpush.bf16.msra.mxu0 0
          %702 = vmatpush.bf16.msra.mxu0 0
          %703 = vmatpush.bf16.msra.mxu0 0
          %704 = vmatpush.bf16.msra.mxu0 %v695
          %705 = vmatmul.bf16.gmra.mxu0 %v691
          %v706 = vpop.f32.mrf.mxu0
          %v707 = vadd.f32 0.0, %v706
          %v708 = vpop.f32.mrf.mxu0
          %709 = vdwg.mxu0
          %v710 = vpack.c.bf16 %v707, %v707
          %v711 = vld [vmem:[%s6] sm:$0xf]
          %v713 = vunpack.c.l.b16 %v635
          %v714 = vpack.c.b16 %v713, %v713
          %715 = vrot.lane.b32.xlu0 %v714, 120
          %v716 = vpop.permute.xlu0 %715
          %717 = vrot.lane.b32.xlu0 %v640, 88
          %v718 = vpop.permute.xlu0 %717
          %v720 = vsel %vm643, %v716, 0
          %v723 = vsel %vm643, %v718, 0
          %725 = vmatpush.bf16.xpose.msra.mxu0 0
          %726 = vmatpush.bf16.xpose.msra.mxu0 0
          %727 = vmatpush.bf16.xpose.msra.mxu0 0
          %728 = vmatpush.bf16.xpose.msra.mxu0 0
          %729 = vmatpush.bf16.xpose.msra.mxu0 0
          %730 = vmatpush.bf16.xpose.msra.mxu0 0
          %731 = vmatpush.bf16.xpose.msra.mxu0 0
          %732 = vmatpush.bf16.xpose.msra.mxu0 %v723
          %733 = vmatmul.bf16.gmra.mxu0 %v720
          %v734 = vpop.f32.mrf.mxu0
          %v735 = vadd.f32 %v637, %v734
          %v736 = vpop.f32.mrf.mxu0
          %737 = vdwg.mxu0
          %v738 = vsel %vm643, %v735, -inf
          %739 = vmax.xlane.f32.xlu0 %v738
          %v740 = vpop.xlane.xlu0 %739
          %v741 = vsub.f32 %v735, %v740
          %v742 = vmul.f32 %v741, 1.442695
          %v743 = vpow.pop %v742
          %v744 = vsel %vm643, %v743, 0.0
          %745 = vadd.xlane.f32.xlu0 %v744
          %v746 = vpop.xlane.xlu0 %745
          %v747 = vrcp.pop %v746
          %v748 = vmul.f32 %v746, %v747
          %v749 = vsub.f32 1.0, %v748
          %v750 = vmul.f32 %v747, %v749
          %v751 = vadd.f32 %v747, %v750
          %vm752 = vweird.f32 %v746
          %vm753 = vweird.f32 %v747
          %vm754 = vmor %vm752, %vm753
          %v755 = vsel %vm754, %v747, %v751
          %v756 = vand.u32 2147483647, %v746
          %vm757 = vcmp.eq.f32.partialorder %v756, 8.507059e+37
          %v758 = vand.u32 %v746, 2147483648
          %v759 = vor.u32 1.1754944e-38, %v758
          %v760 = vsel %vm757, %v759, %v755
          %v761 = vmul.f32 %v743, %v760
          %v762 = vpack.c.bf16 %v761, %v761
          %763 = vrot.lane.b32.xlu0 %v640, 56
          %v764 = vpop.permute.xlu0 %763
          %v766 = vsel %vm643, %v762, 0
          %v769 = vsel %vm693, %v764, 0
          %771 = vmatpush.bf16.msra.mxu0 0
          %772 = vmatpush.bf16.msra.mxu0 0
          %773 = vmatpush.bf16.msra.mxu0 0
          %774 = vmatpush.bf16.msra.mxu0 0
          %775 = vmatpush.bf16.msra.mxu0 0
          %776 = vmatpush.bf16.msra.mxu0 0
          %777 = vmatpush.bf16.msra.mxu0 0
          %778 = vmatpush.bf16.msra.mxu0 %v769
          %779 = vmatmul.bf16.gmra.mxu0 %v766
          %v780 = vpop.f32.mrf.mxu0
          %v781 = vadd.f32 0.0, %v780
          %v782 = vpop.f32.mrf.mxu0
          %783 = vdwg.mxu0
          %v784 = vpack.c.bf16 %v781, %v781
          %v785 = vld [vmem:[%s6 + $0x4] sm:$0xf]
          %v787 = vsel %vm643, %v784, 0
          %v790 = vsel %vm693, %v785, 0
          %792 = vmatpush.bf16.msra.mxu0 0
          %793 = vmatpush.bf16.msra.mxu0 0
          %794 = vmatpush.bf16.msra.mxu0 0
          %795 = vmatpush.bf16.msra.mxu0 0
          %796 = vmatpush.bf16.msra.mxu0 0
          %797 = vmatpush.bf16.msra.mxu0 0
          %798 = vmatpush.bf16.msra.mxu0 0
          %799 = vmatpush.bf16.msra.mxu0 %v790
          %800 = vmatmul.bf16.gmra.mxu0 %v787
          %v801 = vpop.f32.mrf.mxu0
          %v802 = vadd.f32 0.0, %v801
          %v803 = vpop.f32.mrf.mxu0
          %804 = vdwg.mxu0
          %v806 = vsel %vm643, %v710, 0
          %v809 = vsel %vm693, %v711, 0
          %811 = vmatpush.bf16.msra.mxu0 0
          %812 = vmatpush.bf16.msra.mxu0 0
          %813 = vmatpush.bf16.msra.mxu0 0
          %814 = vmatpush.bf16.msra.mxu0 0
          %815 = vmatpush.bf16.msra.mxu0 0
          %816 = vmatpush.bf16.msra.mxu0 0
          %817 = vmatpush.bf16.msra.mxu0 0
          %818 = vmatpush.bf16.msra.mxu0 %v809
          %819 = vmatmul.bf16.gmra.mxu0 %v806
          %v820 = vpop.f32.mrf.mxu0
          %v821 = vadd.f32 %v802, %v820
          %v822 = vpop.f32.mrf.mxu0
          %823 = vdwg.mxu0
          %824 = vrot.lane.b32.xlu0 %v714, 112
          %v825 = vpop.permute.xlu0 %824
          %826 = vrot.lane.b32.xlu0 %v640, 80
          %v827 = vpop.permute.xlu0 %826
          %v829 = vsel %vm643, %v825, 0
          %v832 = vsel %vm643, %v827, 0
          %834 = vmatpush.bf16.xpose.msra.mxu0 0
          %835 = vmatpush.bf16.xpose.msra.mxu0 0
          %836 = vmatpush.bf16.xpose.msra.mxu0 0
          %837 = vmatpush.bf16.xpose.msra.mxu0 0
          %838 = vmatpush.bf16.xpose.msra.mxu0 0
          %839 = vmatpush.bf16.xpose.msra.mxu0 0
          %840 = vmatpush.bf16.xpose.msra.mxu0 0
          %841 = vmatpush.bf16.xpose.msra.mxu0 %v832
          %842 = vmatmul.bf16.gmra.mxu0 %v829
          %v843 = vpop.f32.mrf.mxu0
          %v844 = vadd.f32 %v637, %v843
          %v845 = vpop.f32.mrf.mxu0
          %846 = vdwg.mxu0
          %v847 = vsel %vm643, %v844, -inf
          %848 = vmax.xlane.f32.xlu0 %v847
          %v849 = vpop.xlane.xlu0 %848
          %v850 = vsub.f32 %v844, %v849
          %v851 = vmul.f32 %v850, 1.442695
          %v852 = vpow.pop %v851
          %v853 = vsel %vm643, %v852, 0.0
          %854 = vadd.xlane.f32.xlu0 %v853
          %v855 = vpop.xlane.xlu0 %854
          %v856 = vrcp.pop %v855
          %v857 = vmul.f32 %v855, %v856
          %v858 = vsub.f32 1.0, %v857
          %v859 = vmul.f32 %v856, %v858
          %v860 = vadd.f32 %v856, %v859
          %vm861 = vweird.f32 %v855
          %vm862 = vweird.f32 %v856
          %vm863 = vmor %vm861, %vm862
          %v864 = vsel %vm863, %v856, %v860
          %v865 = vand.u32 2147483647, %v855
          %vm866 = vcmp.eq.f32.partialorder %v865, 8.507059e+37
          %v867 = vand.u32 %v855, 2147483648
          %v868 = vor.u32 1.1754944e-38, %v867
          %v869 = vsel %vm866, %v868, %v864
          %v870 = vmul.f32 %v852, %v869
          %v871 = vpack.c.bf16 %v870, %v870
          %872 = vrot.lane.b32.xlu0 %v640, 48
          %v873 = vpop.permute.xlu0 %872
          %v875 = vsel %vm643, %v871, 0
          %v878 = vsel %vm693, %v873, 0
          %880 = vmatpush.bf16.msra.mxu0 0
          %881 = vmatpush.bf16.msra.mxu0 0
          %882 = vmatpush.bf16.msra.mxu0 0
          %883 = vmatpush.bf16.msra.mxu0 0
          %884 = vmatpush.bf16.msra.mxu0 0
          %885 = vmatpush.bf16.msra.mxu0 0
          %886 = vmatpush.bf16.msra.mxu0 0
          %887 = vmatpush.bf16.msra.mxu0 %v878
          %888 = vmatmul.bf16.gmra.mxu0 %v875
          %v889 = vpop.f32.mrf.mxu0
          %v890 = vadd.f32 0.0, %v889
          %v891 = vpop.f32.mrf.mxu0
          %892 = vdwg.mxu0
          %v893 = vpack.c.bf16 %v890, %v890
          %v894 = vld [vmem:[%s6 + $0x8] sm:$0xf]
          %v896 = vsel %vm643, %v893, 0
          %v899 = vsel %vm693, %v894, 0
          %901 = vmatpush.bf16.msra.mxu0 0
          %902 = vmatpush.bf16.msra.mxu0 0
          %903 = vmatpush.bf16.msra.mxu0 0
          %904 = vmatpush.bf16.msra.mxu0 0
          %905 = vmatpush.bf16.msra.mxu0 0
          %906 = vmatpush.bf16.msra.mxu0 0
          %907 = vmatpush.bf16.msra.mxu0 0
          %908 = vmatpush.bf16.msra.mxu0 %v899
          %909 = vmatmul.bf16.gmra.mxu0 %v896
          %v910 = vpop.f32.mrf.mxu0
          %v911 = vadd.f32 0.0, %v910
          %v912 = vpop.f32.mrf.mxu0
          %913 = vdwg.mxu0
          %v914 = vadd.f32 %v821, %v911
          %915 = vrot.lane.b32.xlu0 %v714, 104
          %v916 = vpop.permute.xlu0 %915
          %917 = vrot.lane.b32.xlu0 %v640, 72
          %v918 = vpop.permute.xlu0 %917
          %v920 = vsel %vm643, %v916, 0
          %v923 = vsel %vm643, %v918, 0
          %925 = vmatpush.bf16.xpose.msra.mxu0 0
          %926 = vmatpush.bf16.xpose.msra.mxu0 0
          %927 = vmatpush.bf16.xpose.msra.mxu0 0
          %928 = vmatpush.bf16.xpose.msra.mxu0 0
          %929 = vmatpush.bf16.xpose.msra.mxu0 0
          %930 = vmatpush.bf16.xpose.msra.mxu0 0
          %931 = vmatpush.bf16.xpose.msra.mxu0 0
          %932 = vmatpush.bf16.xpose.msra.mxu0 %v923
          %933 = vmatmul.bf16.gmra.mxu0 %v920
          %v934 = vpop.f32.mrf.mxu0
          %v935 = vadd.f32 %v637, %v934
          %v936 = vpop.f32.mrf.mxu0
          %937 = vdwg.mxu0
          %v938 = vsel %vm643, %v935, -inf
          %939 = vmax.xlane.f32.xlu0 %v938
          %v940 = vpop.xlane.xlu0 %939
          %v941 = vsub.f32 %v935, %v940
          %v942 = vmul.f32 %v941, 1.442695
          %v943 = vpow.pop %v942
          %v944 = vsel %vm643, %v943, 0.0
          %945 = vadd.xlane.f32.xlu0 %v944
          %v946 = vpop.xlane.xlu0 %945
          %v947 = vrcp.pop %v946
          %v948 = vmul.f32 %v946, %v947
          %v949 = vsub.f32 1.0, %v948
          %v950 = vmul.f32 %v947, %v949
          %v951 = vadd.f32 %v947, %v950
          %vm952 = vweird.f32 %v946
          %vm953 = vweird.f32 %v947
          %vm954 = vmor %vm952, %vm953
          %v955 = vsel %vm954, %v947, %v951
          %v956 = vand.u32 2147483647, %v946
          %vm957 = vcmp.eq.f32.partialorder %v956, 8.507059e+37
          %v958 = vand.u32 %v946, 2147483648
          %v959 = vor.u32 1.1754944e-38, %v958
          %v960 = vsel %vm957, %v959, %v955
          %v961 = vmul.f32 %v943, %v960
          %v962 = vpack.c.bf16 %v961, %v961
          %963 = vrot.lane.b32.xlu0 %v640, 40
          %v964 = vpop.permute.xlu0 %963
          %v966 = vsel %vm643, %v962, 0
          %v969 = vsel %vm693, %v964, 0
          %971 = vmatpush.bf16.msra.mxu0 0
          %972 = vmatpush.bf16.msra.mxu0 0
          %973 = vmatpush.bf16.msra.mxu0 0
          %974 = vmatpush.bf16.msra.mxu0 0
          %975 = vmatpush.bf16.msra.mxu0 0
          %976 = vmatpush.bf16.msra.mxu0 0
          %977 = vmatpush.bf16.msra.mxu0 0
          %978 = vmatpush.bf16.msra.mxu0 %v969
          %979 = vmatmul.bf16.gmra.mxu0 %v966
          %v980 = vpop.f32.mrf.mxu0
          %v981 = vadd.f32 0.0, %v980
          %v982 = vpop.f32.mrf.mxu0
          %983 = vdwg.mxu0
          %v984 = vpack.c.bf16 %v981, %v981
          %v985 = vld [vmem:[%s6 + $0xc] sm:$0xf]
          %v987 = vsel %vm643, %v984, 0
          %v990 = vsel %vm693, %v985, 0
          %992 = vmatpush.bf16.msra.mxu0 0
          %993 = vmatpush.bf16.msra.mxu0 0
          %994 = vmatpush.bf16.msra.mxu0 0
          %995 = vmatpush.bf16.msra.mxu0 0
          %996 = vmatpush.bf16.msra.mxu0 0
          %997 = vmatpush.bf16.msra.mxu0 0
          %998 = vmatpush.bf16.msra.mxu0 0
          %999 = vmatpush.bf16.msra.mxu0 %v990
          %1000 = vmatmul.bf16.gmra.mxu0 %v987
          %v1001 = vpop.f32.mrf.mxu0
          %v1002 = vadd.f32 0.0, %v1001
          %v1003 = vpop.f32.mrf.mxu0
          %1004 = vdwg.mxu0
          %v1005 = vadd.f32 %v914, %v1002
          %v1006 = vadd.f32 %v556, %v1005
          %v1007 = vld [vmem:[%s7] sm:$0x1]
          %v1009 = vperm.slane %v1007, 0
          %v1011 = vadd.f32 %v1006, %v1009
          %1012 = vst.msk [vmem:[#allocation2] sm:$0xff] %vm559, %v1011
          %v1013 = vld [vmem:[%s8] sm:$0x1]
          %v1014 = vld [vmem:[%s9] sm:$0x1]
          %v1015 = vsel %vm559, %v1011, 0.0
          %1016 = vadd.xlane.f32.xlu0 %v1015
          %v1017 = vpop.xlane.xlu0 %1016
          %v1018 = vmul.f32 %v1017, %v569
          %v1019 = vsub.f32 %v1011, %v1018
          %v1020 = vmul.f32 %v1019, %v1019
          %v1021 = vsel %vm559, %v1020, 0.0
          %1022 = vadd.xlane.f32.xlu0 %v1021
          %v1023 = vpop.xlane.xlu0 %1022
          %v1024 = vmul.f32 %v1023, %v569
          %v1025 = vadd.f32 %v1024, 1e-05
          %v1026 = vrsqrt.pop %v1025
          %v1027 = vmul.f32 %v1026, %v1025
          %v1028 = vmul.f32 %v1027, %v1026
          %v1029 = vmul.f32 0.5, %v1028
          %v1030 = vsub.f32 1.5, %v1029
          %v1031 = vmul.f32 %v1026, %v1030
          %vm1032 = vweird.f32 %v1025
          %vm1033 = vweird.f32 %v1026
          %vm1034 = vmor %vm1032, %vm1033
          %v1035 = vsel %vm1034, %v1026, %v1031
          %v1036 = vmul.f32 %v1019, %v1035
          %v1038 = vperm.slane %v1013, 0
          %v1040 = vmul.f32 %v1036, %v1038
          %v1042 = vperm.slane %v1014, 0
          %v1044 = vadd.f32 %v1040, %v1042
          %v1045 = vpack.c.bf16 %v1044, %v1044
          %vm1046 = vcmask 257024
          %1047 = vst.msk [vmem:[#allocation3] sm:$0xf] %vm1046, %v1045
          %1048 = vst.msk [vmem:[#allocation4] sm:$0xff] %vm559, 0.0
        $region84: #{tpu_custom_call.1} parent=75 // pred_fallthru
          _
        %v1049 = vld [vmem:[#allocation3] sm:$0xf]
        %v1050 = vld [vmem:[%s540] sm:$0xf]
        %v1051 = vld [vmem:[%s540 + $0x4] sm:$0xf]
        %v1052 = vld [vmem:[%s540 + $0x8] sm:$0xf]
        %v1053 = vld [vmem:[%s540 + $0xc] sm:$0xf]
        %v1054 = vld [vmem:[%s543] sm:$0x1]
        %v1056 = vperm.slane %v1054, 0
        %v1062 = vunpack.c.l.b16 %v1050
        %v1063 = vunpack.c.l.b16 %v1051
        %v1064 = vunpack.c.l.b16 %v1052
        %v1065 = vunpack.c.l.b16 %v1053
        %v1066 = vpack.c.b16 %v1063, %v1062
        %v1067 = vpack.c.b16 %v1065, %v1064
        %vm1070 = vcmask 261120
        %v1072 = vsel %vm1070, %v1049, 0
        %1074 = vmatpush.bf16.msra.mxu0 0
        %1075 = vmatpush.bf16.msra.mxu0 0
        %1076 = vmatpush.bf16.msra.mxu0 0
        %1077 = vmatpush.bf16.msra.mxu0 0
        %1078 = vmatpush.bf16.msra.mxu0 0
        %1079 = vmatpush.bf16.msra.mxu0 0
        %1080 = vmatpush.bf16.msra.mxu0 %v1067
        %1081 = vmatpush.bf16.msra.mxu0 %v1066
        %1082 = vmatmul.bf16.gmra.mxu0 %v1072
        %v1083 = vpop.f32.mrf.mxu0
        %v1084 = vadd.f32 %v1056, %v1083
        %v1085 = vpop.f32.mrf.mxu0
        %1086 = vdwg.mxu0
        %v1087 = vmul.f32 %v1084, %v1084
        %v1088 = vmul.f32 %v1084, %v1087
        %v1089 = vmul.f32 %v1088, 0.044715
        %v1090 = vadd.f32 %v1084, %v1089
        %v1091 = vmul.f32 %v1090, 0.7978846
        %v1092 = vtanh.pop %v1091
        %v1093 = vadd.f32 %v1092, 1.0
        %v1094 = vmul.f32 %v1093, 0.5
        %v1095 = vmul.f32 %v1084, %v1094
        %v1096 = vpack.c.bf16 %v1095, %v1095
        %v1097 = vld [vmem:[#allocation4] sm:$0xff]
        %v1098 = vld [vmem:[%s548] sm:$0xf]
        %v1099 = vld [vmem:[%s548 + $0x4] sm:$0xf]
        %v1100 = vld [vmem:[%s548 + $0x8] sm:$0xf]
        %v1101 = vld [vmem:[%s548 + $0xc] sm:$0xf]
        %v1102 = vld [vmem:[%s548 + $0x10] sm:$0xf]
        %v1103 = vld [vmem:[%s548 + $0x14] sm:$0xf]
        %v1104 = vld [vmem:[%s548 + $0x18] sm:$0xf]
        %v1105 = vld [vmem:[%s548 + $0x1c] sm:$0xf]
        %v1106 = vld [vmem:[%s548 + $0x20] sm:$0xf]
        %v1107 = vld [vmem:[%s548 + $0x24] sm:$0xf]
        %v1108 = vld [vmem:[%s548 + $0x28] sm:$0xf]
        %v1109 = vld [vmem:[%s548 + $0x2c] sm:$0xf]
        %v1110 = vld [vmem:[%s548 + $0x30] sm:$0xf]
        %v1111 = vld [vmem:[%s548 + $0x34] sm:$0xf]
        %v1112 = vld [vmem:[%s548 + $0x38] sm:$0xf]
        %v1113 = vld [vmem:[%s548 + $0x3c] sm:$0xf]
        %v1130 = vunpack.c.l.b16 %v1098
        %v1131 = vunpack.c.l.b16 %v1099
        %v1132 = vunpack.c.l.b16 %v1100
        %v1133 = vunpack.c.l.b16 %v1101
        %v1134 = vunpack.c.l.b16 %v1102
        %v1135 = vunpack.c.l.b16 %v1103
        %v1136 = vunpack.c.l.b16 %v1104
        %v1137 = vunpack.c.l.b16 %v1105
        %v1138 = vunpack.c.l.b16 %v1106
        %v1139 = vunpack.c.l.b16 %v1107
        %v1140 = vunpack.c.l.b16 %v1108
        %v1141 = vunpack.c.l.b16 %v1109
        %v1142 = vunpack.c.l.b16 %v1110
        %v1143 = vunpack.c.l.b16 %v1111
        %v1144 = vunpack.c.l.b16 %v1112
        %v1145 = vunpack.c.l.b16 %v1113
        %v1146 = vpack.c.b16 %v1131, %v1130
        %v1147 = vpack.c.b16 %v1133, %v1132
        %v1148 = vpack.c.b16 %v1135, %v1134
        %v1149 = vpack.c.b16 %v1137, %v1136
        %v1150 = vpack.c.b16 %v1139, %v1138
        %v1151 = vpack.c.b16 %v1141, %v1140
        %v1152 = vpack.c.b16 %v1143, %v1142
        %v1153 = vpack.c.b16 %v1145, %v1144
        %1162 = vmatpush.bf16.msra.mxu0 %v1153
        %1163 = vmatpush.bf16.msra.mxu0 %v1152
        %1164 = vmatpush.bf16.msra.mxu0 %v1151
        %1165 = vmatpush.bf16.msra.mxu0 %v1150
        %1166 = vmatpush.bf16.msra.mxu0 %v1149
        %1167 = vmatpush.bf16.msra.mxu0 %v1148
        %1168 = vmatpush.bf16.msra.mxu0 %v1147
        %1169 = vmatpush.bf16.msra.mxu0 %v1146
        %1170 = vmatmul.bf16.gmra.mxu0 %v1096
        %v1171 = vpop.f32.mrf.mxu0
        %v1172 = vadd.f32 0.0, %v1171
        %v1173 = vpop.f32.mrf.mxu0
        %1174 = vdwg.mxu0
        %v1175 = vadd.f32 %v1097, %v1172
        %1176 = vst.msk [vmem:[#allocation4] sm:$0xff] %vm1070, %v1175
        // Predicated region
        $region85: #{tpu_custom_call.1} parent=75 // pred_check
          %p1177 = pneg %p551
        $region86: #{tpu_custom_call.1} parent=75 // pred_check_branch
          %1179 = sbr.rel (%p1177) target = $region88
        $region87: #{tpu_custom_call.1} parent=75 // pred_region
          %v1180 = vld [vmem:[#allocation2] sm:$0xff]
          %v1181 = vld [vmem:[#allocation4] sm:$0xff]
          %v1182 = vadd.f32 %v1180, %v1181
          %v1183 = vld [vmem:[%s13] sm:$0x1]
          %v1185 = vperm.slane %v1183, 0
          %v1187 = vadd.f32 %v1182, %v1185
          %v1188 = vpack.c.bf16 %v1187, %v1187
          %vm1189 = vcmask 257024
          %1190 = vst.msk [vmem:[%s536] sm:$0xf] %vm1189, %v1188
        $region88: #{tpu_custom_call.1} parent=75 // pred_fallthru
          _
        %s1191 = sand.u32 %s365, 1
        %s1192 = scalar_lea.sflag [#allocation7], %s1191
        %s1193 = sand.u32 %s365, 1
        %s1194 = smul.addr %s1193, 4
        %s1195 = scalar_lea.vmem [#allocation8], %s1194
        // Predicated region
        $region89: #{tpu_custom_call.1} parent=75 // pred_check
          %p1196 = pneg %p375
        $region90: #{tpu_custom_call.1} parent=75 // pred_check_branch
          %1198 = sbr.rel (%p1196) target = $region92
        $region91: #{tpu_custom_call.1} parent=75 // pred_region
          %1200 = vsyncadd %s1192, 0
          %s1201 = smul.addr %s35, 4
          %s1202 = scalar_lea.hbm %s14, %s1201
          %s1204 = sshll.u32 %s1195, 4
          %s1205 = int_to_ptr.vmem [resolvable:$true] %s1204
          %s1206 = sshll.u32 %s1202, 4
          %s1207 = int_to_ptr.hbm [resolvable:$true] %s1206
          %1209 = dma.vmem_to_hbm [thread:$0]  %s1205, 64, %s1207, %s1192
        $region92: #{tpu_custom_call.1} parent=75 // pred_fallthru
          _
      $region76: #{tpu_custom_call.1} parent=5 // pred_fallthru
        _
      %p1210 = scmp.le.s32.totalorder 2, %s26
      // Predicated region
      $region93: #{tpu_custom_call.1} parent=5 // pred_check
        %p1211 = pneg %p1210
      $region94: #{tpu_custom_call.1} parent=5 // pred_check_branch
        %1213 = sbr.rel (%p1211) target = $region96
      $region95: #{tpu_custom_call.1} parent=5 // pred_region
        %s1214 = ssub.s32 %s26, 2
        // Predicated region
        $region97: #{tpu_custom_call.1} parent=95 // pred_check
          %p1215 = pneg %p381
        $region98: #{tpu_custom_call.1} parent=95 // pred_check_branch
          %1217 = sbr.rel (%p1215) target = $region100
        $region99: #{tpu_custom_call.1} parent=95 // pred_region
          %s1218 = sand.u32 %s366, 1
          %s1219 = scalar_lea.sflag [#allocation7], %s1218
          %s1220 = sand.u32 %s366, 1
          %s1221 = smul.addr %s1220, 4
          %s1222 = scalar_lea.vmem [#allocation8], %s1221
          %1224 = dma.done %s1219, 64
        $region100: #{tpu_custom_call.1} parent=95 // pred_fallthru
          _
      $region96: #{tpu_custom_call.1} parent=5 // pred_fallthru
        _
    $region6: #{tpu_custom_call.1} parent=1 // loop_footer
      %s30 = sadd.s32 1, %s26
    $region7: #{tpu_custom_call.1} parent=1 // loop_footer_branch
      %25 = sbr.rel target = $region3
    $region8: #{tpu_custom_call.1} parent=1 // loop_exit
      _
    %1225 = vsyncpa [#allocation6], 1
    %s1226 = scalar_lea.sflag [#allocation6], 1
    %1227 = vsyncpa %s1226, 1
    %1228 = vsyncpa [#allocation7], 1
    %s1229 = scalar_lea.sflag [#allocation7], 1
    %1230 = vsyncpa %s1229, 1

</llo_original>
